<compile_context>
chip_gen: v7x
topology: tpu7x:2x2x1
jax: 0.10.0
libtpu: 0.0.40
codegen_flags: <defaults>
</compile_context>

<pallas_src>
import math
import jax
import jax.numpy as jnp
from jax import lax
from jax.experimental import pallas as pl
from jax.experimental.pallas import tpu as pltpu

# ---------------- model hyper-parameters (small, synthetic) ----------------
B = 2           # batch
S = 8           # sequence length
D_MODEL = 32    # d_model
N_HEAD = 4      # number of attention heads
FFN_HIDDEN = 64
D_HEAD = D_MODEL // N_HEAD
LN_EPS = 1e-12
MASK_FILL = -10000.0


def _layer_norm(y, gamma, beta):
    mu = jnp.mean(y, axis=-1, keepdims=True)
    var = jnp.mean((y - mu) ** 2, axis=-1, keepdims=True)
    return (y - mu) * lax.rsqrt(var + LN_EPS) * gamma + beta


# vecs_ref rows: 0:bq 1:(sum_h bv_h@Wo_h + bo) 2:g1 3:be1 4:b2 5:g2 6:be2 7:pad
def encoder_layer_kernel(x_ref, mask_ref, wqk_ref, wvo_ref, w1_ref, b1_ref,
                         w2_ref, vecs_ref, out_ref):
    x = x_ref[0]                          # (S, D) f32
    keep = mask_ref[0] != 0               # (S, S) bool, per-batch padding mask
    vecs = vecs_ref[...]                  # (8, D) f32
    Sn, Dn = x.shape

    xb = x.astype(jnp.bfloat16)

    # ---- fused Q/K projection (bf16 MXU, f32 accumulate) --------------------
    qk = jnp.dot(xb, wqk_ref[...], preferred_element_type=jnp.float32)  # (S, 2D)
    scale = 1.0 / math.sqrt(D_HEAD)
    q = (qk[:, :Dn] + vecs[0:1, :]) * scale      # query bias kept; key bias is
    k = qk[:, Dn:]                               # softmax-dead (dropped exactly)

    # ---- value path folded with Wo: x @ Wvo, 128-lane-dense -----------------
    vo = jnp.dot(xb, wvo_ref[...], preferred_element_type=jnp.float32)  # (S, H*D)

    qb = q.astype(jnp.bfloat16)
    kb = k.astype(jnp.bfloat16)
    vob = vo.astype(jnp.bfloat16)

    nt = (((1,), (1,)), ((), ()))                # q @ k^T without materializing .T
    attn = jnp.zeros((Sn, Dn), jnp.float32)
    for h in range(N_HEAD):                      # static unroll over 4 heads
        lo, hi = h * D_HEAD, (h + 1) * D_HEAD
        s = lax.dot_general(qb[:, lo:hi], kb[:, lo:hi], nt,
                            preferred_element_type=jnp.float32)         # (S, S)
        s = jnp.where(keep, s, MASK_FILL)        # exact masked_fill semantics
        s = s - jnp.max(s, axis=-1, keepdims=True)
        p = jnp.exp(s)
        p = p * pl.reciprocal(jnp.sum(p, axis=-1, keepdims=True), approx=True)
        attn = attn + jnp.dot(p.astype(jnp.bfloat16),
                              vob[:, h * Dn:(h + 1) * Dn],
                              preferred_element_type=jnp.float32)
    attn = attn + vecs[1:2, :]                   # folded sum_h bv_h@Wo_h + bo

    # dropout1 -> identity (eval mode)
    x1 = _layer_norm(attn + x, vecs[2:3, :], vecs[3:4, :])

    # ---- position-wise feed-forward -----------------------------------------
    hdn = jnp.dot(x1.astype(jnp.bfloat16), w1_ref[...],
                  preferred_element_type=jnp.float32) + b1_ref[...]
    hdn = jnp.maximum(hdn, 0.0)                  # ReLU (FFN dropout -> identity)
    ffn = jnp.dot(hdn.astype(jnp.bfloat16), w2_ref[...],
                  preferred_element_type=jnp.float32) + vecs[4:5, :]

    # dropout2 -> identity (eval mode)
    out_ref[0] = _layer_norm(ffn + x1, vecs[5:6, :], vecs[6:7, :])


@jax.jit
def encoder_layer(x, src_mask, params):
    """x: (B, S, D) f32, src_mask: (B, 1, S, S) int32 (0 = masked key)."""
    Bn, Sn, Dn = x.shape
    mask = src_mask[:, 0].astype(jnp.int32)                         # (B, S, S)

    # Fused Q/K weight (key bias dropped: mathematically no effect on softmax).
    wqk = jnp.concatenate([params["wq"], params["wk"]], axis=1).astype(jnp.bfloat16)

    # Fold Wo into Wv per head, plus the constant bias sum_h bv_h @ Wo_h + bo.
    wvo_blocks = []
    bvo = jnp.zeros((1, Dn), jnp.float32)
    for h in range(N_HEAD):
        lo, hi = h * D_HEAD, (h + 1) * D_HEAD
        wvo_blocks.append(params["wv"][:, lo:hi] @ params["wo"][lo:hi, :])
        bvo = bvo + params["bv"][:, lo:hi] @ params["wo"][lo:hi, :]
    wvo = jnp.concatenate(wvo_blocks, axis=1).astype(jnp.bfloat16)  # (D, H*D)=(32,128)
    attn_bias = bvo + params["bo"]                                  # (1, D)

    vecs = jnp.concatenate([
        params["bq"], attn_bias, params["g1"], params["be1"],
        params["b2"], params["g2"], params["be2"],
        jnp.zeros((1, Dn), jnp.float32),
    ], axis=0)                                                       # (8, D)

    w1 = params["w1"].astype(jnp.bfloat16)
    w2 = params["w2"].astype(jnp.bfloat16)
    b1 = params["b1"]

    fn = pl.pallas_call(
        encoder_layer_kernel,
        out_shape=jax.ShapeDtypeStruct((Bn, Sn, Dn), jnp.float32),
        grid=(Bn,),
        in_specs=[
            pl.BlockSpec((1, Sn, Dn), lambda b: (b, 0, 0)),          # x
            pl.BlockSpec((1, Sn, Sn), lambda b: (b, 0, 0)),          # mask
            pl.BlockSpec((Dn, 2 * Dn), lambda b: (0, 0)),            # Wqk (resident)
            pl.BlockSpec((Dn, N_HEAD * Dn), lambda b: (0, 0)),       # Wvo (resident)
            pl.BlockSpec((Dn, FFN_HIDDEN), lambda b: (0, 0)),        # W1
            pl.BlockSpec((1, FFN_HIDDEN), lambda b: (0, 0)),         # b1
            pl.BlockSpec((FFN_HIDDEN, Dn), lambda b: (0, 0)),        # W2
            pl.BlockSpec((8, Dn), lambda b: (0, 0)),                 # vecs slab
        ],
        out_specs=pl.BlockSpec((1, Sn, Dn), lambda b: (b, 0, 0)),
        compiler_params=pltpu.CompilerParams(
            dimension_semantics=("parallel",)),                      # 2 TCs on v7x
    )
    return fn(x, mask, wqk, wvo, w1, b1, w2, vecs)


# ---------------- pure-JAX reference (eval-mode PyTorch semantics) ----------
def encoder_layer_reference(x, src_mask, params):
    def lnorm(y, g, b):
        mu = jnp.mean(y, -1, keepdims=True)
        var = jnp.mean((y - mu) ** 2, -1, keepdims=True)
        return g * (y - mu) / jnp.sqrt(var + LN_EPS) + b

    def split(t):
        Bn, Sn, _ = t.shape
        return t.reshape(Bn, Sn, N_HEAD, D_HEAD).transpose(0, 2, 1, 3)

    q = x @ params["wq"] + params["bq"]
    k = x @ params["wk"] + params["bk"]
    v = x @ params["wv"] + params["bv"]
    qh, kh, vh = split(q), split(k), split(v)
    s = jnp.einsum("bhqd,bhkd->bhqk", qh, kh) / math.sqrt(D_HEAD)
    s = jnp.where(src_mask == 0, MASK_FILL, s)
    p = jax.nn.softmax(s, axis=-1)
    o = jnp.einsum("bhqk,bhkd->bhqd", p, vh)
    o = o.transpose(0, 2, 1, 3).reshape(x.shape)
    o = o @ params["wo"] + params["bo"]
    x1 = lnorm(o + x, params["g1"], params["be1"])
    h = jnp.maximum(x1 @ params["w1"] + params["b1"], 0.0)
    f = h @ params["w2"] + params["b2"]
    return lnorm(f + x1, params["g2"], params["be2"])


def init_params(key):
    ks = jax.random.split(key, 12)
    sd = 0.02

    def lin(kw, kb, din, dout):
        w = sd * jax.random.normal(kw, (din, dout), jnp.float32)
        b = sd * jax.random.normal(kb, (1, dout), jnp.float32)   # non-zero biases
        return w, b

    wq, bq = lin(ks[0], ks[1], D_MODEL, D_MODEL)
    wk, bk = lin(ks[2], ks[3], D_MODEL, D_MODEL)
    wv, bv = lin(ks[4], ks[5], D_MODEL, D_MODEL)
    wo, bo = lin(ks[6], ks[7], D_MODEL, D_MODEL)
    w1, b1 = lin(ks[8], ks[9], D_MODEL, FFN_HIDDEN)
    w2, b2 = lin(ks[10], ks[11], FFN_HIDDEN, D_MODEL)
    return dict(
        wq=wq, bq=bq, wk=wk, bk=bk, wv=wv, bv=bv, wo=wo, bo=bo,
        w1=w1, b1=b1, w2=w2, b2=b2,
        g1=jnp.ones((1, D_MODEL), jnp.float32),
        be1=jnp.zeros((1, D_MODEL), jnp.float32),
        g2=jnp.ones((1, D_MODEL), jnp.float32),
        be2=jnp.zeros((1, D_MODEL), jnp.float32),
    )


if __name__ == "__main__":
    key = jax.random.PRNGKey(0)
    k_x, k_p = jax.random.split(key)

    x = jax.random.normal(k_x, (B, S, D_MODEL), jnp.float32)

    # padding-style mask: batch 0 attends to everything, batch 1 masks the last
    # two key positions. 1 = keep, 0 = masked (matches masked_fill(mask == 0)).
    mask = jnp.ones((B, 1, S, S), jnp.int32)
    mask = mask.at[1, :, :, S - 2:].set(0)

    params = init_params(k_p)

    out = jax.block_until_ready(encoder_layer(x, mask, params))

    assert out.shape == (B, S, D_MODEL)
    assert bool(jnp.all(jnp.isfinite(out)))

    ref = encoder_layer_reference(x, mask, params)
    err = float(jnp.max(jnp.abs(out - ref)))
    assert bool(jnp.allclose(out, ref, atol=2e-2, rtol=2e-2)), err

    print("KERNEL_OK")
</pallas_src>

<mosaic_0001>
module attributes {stable_mosaic.version = 11 : i64} {
  func.func @encoder_layer_kernel(%arg0: i32, %arg1: memref<1x8x32xf32, #tpu.memory_space<vmem>>, %arg2: memref<1x8x8xi32, #tpu.memory_space<vmem>>, %arg3: memref<32x64xbf16, #tpu.memory_space<vmem>>, %arg4: memref<32x128xbf16, #tpu.memory_space<vmem>>, %arg5: memref<32x64xbf16, #tpu.memory_space<vmem>>, %arg6: memref<1x64xf32, #tpu.memory_space<vmem>>, %arg7: memref<64x32xbf16, #tpu.memory_space<vmem>>, %arg8: memref<8x32xf32, #tpu.memory_space<vmem>>, %arg9: memref<1x8x32xf32, #tpu.memory_space<vmem>>) attributes {dimension_semantics = [#tpu.dimension_semantics<parallel>], iteration_bounds = array<i64: 2>, scalar_prefetch = 0 : i64, scratch_operands = 0 : i64, tpu.core_type = #tpu.core_type<tc>, window_params = [{transform_indices = @transform_0, window_bounds = array<i64: 1, 8, 32>}, {transform_indices = @transform_1, window_bounds = array<i64: 1, 8, 8>}, {pipeline_mode = #tpu.pipeline_mode<synchronous>, transform_indices = @transform_2, window_bounds = array<i64: 32, 64>}, {pipeline_mode = #tpu.pipeline_mode<synchronous>, transform_indices = @transform_3, window_bounds = array<i64: 32, 128>}, {pipeline_mode = #tpu.pipeline_mode<synchronous>, transform_indices = @transform_4, window_bounds = array<i64: 32, 64>}, {pipeline_mode = #tpu.pipeline_mode<synchronous>, transform_indices = @transform_5, window_bounds = array<i64: 1, 64>}, {pipeline_mode = #tpu.pipeline_mode<synchronous>, transform_indices = @transform_6, window_bounds = array<i64: 64, 32>}, {pipeline_mode = #tpu.pipeline_mode<synchronous>, transform_indices = @transform_7, window_bounds = array<i64: 8, 32>}, {transform_indices = @transform_8, window_bounds = array<i64: 1, 8, 32>}]} {
    %c0 = arith.constant 0 : index
    %c0_0 = arith.constant 0 : index
    %c0_1 = arith.constant 0 : index
    %0 = vector.load %arg1[%c0, %c0_0, %c0_1] : memref<1x8x32xf32, #tpu.memory_space<vmem>>, vector<1x8x32xf32>
    %1 = vector.shape_cast %0 : vector<1x8x32xf32> to vector<8x32xf32>
    %c0_2 = arith.constant 0 : index
    %c0_3 = arith.constant 0 : index
    %c0_4 = arith.constant 0 : index
    %2 = vector.load %arg2[%c0_2, %c0_3, %c0_4] : memref<1x8x8xi32, #tpu.memory_space<vmem>>, vector<1x8x8xi32>
    %3 = vector.shape_cast %2 : vector<1x8x8xi32> to vector<8x8xi32>
    %c0_i32 = arith.constant 0 : i32
    %4 = vector.broadcast %c0_i32 : i32 to vector<8x8xi32>
    %5 = arith.cmpi ne, %3, %4 : vector<8x8xi32>
    %c0_5 = arith.constant 0 : index
    %c0_6 = arith.constant 0 : index
    %6 = vector.load %arg8[%c0_5, %c0_6] : memref<8x32xf32, #tpu.memory_space<vmem>>, vector<8x32xf32>
    %7 = arith.truncf %1 : vector<8x32xf32> to vector<8x32xbf16>
    %c0_7 = arith.constant 0 : index
    %c0_8 = arith.constant 0 : index
    %8 = vector.load %arg3[%c0_7, %c0_8] : memref<32x64xbf16, #tpu.memory_space<vmem>>, vector<32x64xbf16>
    %cst = arith.constant dense<0.000000e+00> : vector<8x64xf32>
    %9 = tpu.matmul %7, %8, %cst {dimension_numbers = #tpu.dot_dimension_numbers<[1], [0], [0], [1], [0, 0, 1, 1], [], []>} : vector<8x32xbf16>, vector<32x64xbf16>, vector<8x64xf32> -> vector<8x64xf32>
    %10 = vector.extract_strided_slice %9 {offsets = [0, 0], sizes = [8, 32], strides = [1, 1]} : vector<8x64xf32> to vector<8x32xf32>
    %11 = vector.extract_strided_slice %6 {offsets = [0, 0], sizes = [1, 32], strides = [1, 1]} : vector<8x32xf32> to vector<1x32xf32>
    %12 = vector.broadcast %11 : vector<1x32xf32> to vector<8x32xf32>
    %13 = arith.addf %10, %12 : vector<8x32xf32>
    %cst_9 = arith.constant 0.353553385 : f32
    %14 = vector.broadcast %cst_9 : f32 to vector<8x32xf32>
    %15 = arith.mulf %13, %14 : vector<8x32xf32>
    %16 = vector.extract_strided_slice %9 {offsets = [0, 32], sizes = [8, 32], strides = [1, 1]} : vector<8x64xf32> to vector<8x32xf32>
    %c0_10 = arith.constant 0 : index
    %c0_11 = arith.constant 0 : index
    %17 = vector.load %arg4[%c0_10, %c0_11] : memref<32x128xbf16, #tpu.memory_space<vmem>>, vector<32x128xbf16>
    %cst_12 = arith.constant dense<0.000000e+00> : vector<8x128xf32>
    %18 = tpu.matmul %7, %17, %cst_12 {dimension_numbers = #tpu.dot_dimension_numbers<[1], [0], [0], [1], [0, 0, 1, 1], [], []>} : vector<8x32xbf16>, vector<32x128xbf16>, vector<8x128xf32> -> vector<8x128xf32>
    %19 = arith.truncf %15 : vector<8x32xf32> to vector<8x32xbf16>
    %20 = arith.truncf %16 : vector<8x32xf32> to vector<8x32xbf16>
    %21 = arith.truncf %18 : vector<8x128xf32> to vector<8x128xbf16>
    %cst_13 = arith.constant 0.000000e+00 : f32
    %22 = vector.broadcast %cst_13 : f32 to vector<8x32xf32>
    %23 = vector.extract_strided_slice %19 {offsets = [0, 0], sizes = [8, 8], strides = [1, 1]} : vector<8x32xbf16> to vector<8x8xbf16>
    %24 = vector.extract_strided_slice %20 {offsets = [0, 0], sizes = [8, 8], strides = [1, 1]} : vector<8x32xbf16> to vector<8x8xbf16>
    %cst_14 = arith.constant dense<0.000000e+00> : vector<8x8xf32>
    %25 = tpu.matmul %23, %24, %cst_14 {dimension_numbers = #tpu.dot_dimension_numbers<[1], [1], [0], [0], [0, 0, 1, 0], [], []>} : vector<8x8xbf16>, vector<8x8xbf16>, vector<8x8xf32> -> vector<8x8xf32>
    %cst_15 = arith.constant -1.000000e+04 : f32
    %26 = vector.broadcast %cst_15 : f32 to vector<8x8xf32>
    %27 = arith.select %5, %25, %26 : vector<8x8xi1>, vector<8x8xf32>
    %cst_16 = arith.constant dense<0xFF800000> : vector<8xf32>
    %28 = vector.multi_reduction <maximumf>, %27, %cst_16 [1] : vector<8x8xf32> to vector<8xf32>
    %29 = vector.shape_cast %28 : vector<8xf32> to vector<8x1xf32>
    %30 = vector.broadcast %29 : vector<8x1xf32> to vector<8x8xf32>
    %31 = arith.subf %27, %30 : vector<8x8xf32>
    %32 = math.exp %31 : vector<8x8xf32>
    %cst_17 = arith.constant dense<0.000000e+00> : vector<8xf32>
    %33 = vector.multi_reduction <add>, %32, %cst_17 [1] : vector<8x8xf32> to vector<8xf32>
    %34 = vector.shape_cast %33 : vector<8xf32> to vector<8x1xf32>
    %35 = tpu.reciprocal %34 {approx = true} : vector<8x1xf32> -> vector<8x1xf32>
    %36 = vector.broadcast %35 : vector<8x1xf32> to vector<8x8xf32>
    %37 = arith.mulf %32, %36 : vector<8x8xf32>
    %38 = arith.truncf %37 : vector<8x8xf32> to vector<8x8xbf16>
    %39 = vector.extract_strided_slice %21 {offsets = [0, 0], sizes = [8, 32], strides = [1, 1]} : vector<8x128xbf16> to vector<8x32xbf16>
    %cst_18 = arith.constant dense<0.000000e+00> : vector<8x32xf32>
    %40 = tpu.matmul %38, %39, %cst_18 {dimension_numbers = #tpu.dot_dimension_numbers<[1], [0], [0], [1], [0, 0, 1, 1], [], []>} : vector<8x8xbf16>, vector<8x32xbf16>, vector<8x32xf32> -> vector<8x32xf32>
    %41 = arith.addf %22, %40 : vector<8x32xf32>
    %42 = vector.extract_strided_slice %19 {offsets = [0, 8], sizes = [8, 8], strides = [1, 1]} : vector<8x32xbf16> to vector<8x8xbf16>
    %43 = vector.extract_strided_slice %20 {offsets = [0, 8], sizes = [8, 8], strides = [1, 1]} : vector<8x32xbf16> to vector<8x8xbf16>
    %cst_19 = arith.constant dense<0.000000e+00> : vector<8x8xf32>
    %44 = tpu.matmul %42, %43, %cst_19 {dimension_numbers = #tpu.dot_dimension_numbers<[1], [1], [0], [0], [0, 0, 1, 0], [], []>} : vector<8x8xbf16>, vector<8x8xbf16>, vector<8x8xf32> -> vector<8x8xf32>
    %cst_20 = arith.constant -1.000000e+04 : f32
    %45 = vector.broadcast %cst_20 : f32 to vector<8x8xf32>
    %46 = arith.select %5, %44, %45 : vector<8x8xi1>, vector<8x8xf32>
    %cst_21 = arith.constant dense<0xFF800000> : vector<8xf32>
    %47 = vector.multi_reduction <maximumf>, %46, %cst_21 [1] : vector<8x8xf32> to vector<8xf32>
    %48 = vector.shape_cast %47 : vector<8xf32> to vector<8x1xf32>
    %49 = vector.broadcast %48 : vector<8x1xf32> to vector<8x8xf32>
    %50 = arith.subf %46, %49 : vector<8x8xf32>
    %51 = math.exp %50 : vector<8x8xf32>
    %cst_22 = arith.constant dense<0.000000e+00> : vector<8xf32>
    %52 = vector.multi_reduction <add>, %51, %cst_22 [1] : vector<8x8xf32> to vector<8xf32>
    %53 = vector.shape_cast %52 : vector<8xf32> to vector<8x1xf32>
    %54 = tpu.reciprocal %53 {approx = true} : vector<8x1xf32> -> vector<8x1xf32>
    %55 = vector.broadcast %54 : vector<8x1xf32> to vector<8x8xf32>
    %56 = arith.mulf %51, %55 : vector<8x8xf32>
    %57 = arith.truncf %56 : vector<8x8xf32> to vector<8x8xbf16>
    %58 = vector.extract_strided_slice %21 {offsets = [0, 32], sizes = [8, 32], strides = [1, 1]} : vector<8x128xbf16> to vector<8x32xbf16>
    %cst_23 = arith.constant dense<0.000000e+00> : vector<8x32xf32>
    %59 = tpu.matmul %57, %58, %cst_23 {dimension_numbers = #tpu.dot_dimension_numbers<[1], [0], [0], [1], [0, 0, 1, 1], [], []>} : vector<8x8xbf16>, vector<8x32xbf16>, vector<8x32xf32> -> vector<8x32xf32>
    %60 = arith.addf %41, %59 : vector<8x32xf32>
    %61 = vector.extract_strided_slice %19 {offsets = [0, 16], sizes = [8, 8], strides = [1, 1]} : vector<8x32xbf16> to vector<8x8xbf16>
    %62 = vector.extract_strided_slice %20 {offsets = [0, 16], sizes = [8, 8], strides = [1, 1]} : vector<8x32xbf16> to vector<8x8xbf16>
    %cst_24 = arith.constant dense<0.000000e+00> : vector<8x8xf32>
    %63 = tpu.matmul %61, %62, %cst_24 {dimension_numbers = #tpu.dot_dimension_numbers<[1], [1], [0], [0], [0, 0, 1, 0], [], []>} : vector<8x8xbf16>, vector<8x8xbf16>, vector<8x8xf32> -> vector<8x8xf32>
    %cst_25 = arith.constant -1.000000e+04 : f32
    %64 = vector.broadcast %cst_25 : f32 to vector<8x8xf32>
    %65 = arith.select %5, %63, %64 : vector<8x8xi1>, vector<8x8xf32>
    %cst_26 = arith.constant dense<0xFF800000> : vector<8xf32>
    %66 = vector.multi_reduction <maximumf>, %65, %cst_26 [1] : vector<8x8xf32> to vector<8xf32>
    %67 = vector.shape_cast %66 : vector<8xf32> to vector<8x1xf32>
    %68 = vector.broadcast %67 : vector<8x1xf32> to vector<8x8xf32>
    %69 = arith.subf %65, %68 : vector<8x8xf32>
    %70 = math.exp %69 : vector<8x8xf32>
    %cst_27 = arith.constant dense<0.000000e+00> : vector<8xf32>
    %71 = vector.multi_reduction <add>, %70, %cst_27 [1] : vector<8x8xf32> to vector<8xf32>
    %72 = vector.shape_cast %71 : vector<8xf32> to vector<8x1xf32>
    %73 = tpu.reciprocal %72 {approx = true} : vector<8x1xf32> -> vector<8x1xf32>
    %74 = vector.broadcast %73 : vector<8x1xf32> to vector<8x8xf32>
    %75 = arith.mulf %70, %74 : vector<8x8xf32>
    %76 = arith.truncf %75 : vector<8x8xf32> to vector<8x8xbf16>
    %77 = vector.extract_strided_slice %21 {offsets = [0, 64], sizes = [8, 32], strides = [1, 1]} : vector<8x128xbf16> to vector<8x32xbf16>
    %cst_28 = arith.constant dense<0.000000e+00> : vector<8x32xf32>
    %78 = tpu.matmul %76, %77, %cst_28 {dimension_numbers = #tpu.dot_dimension_numbers<[1], [0], [0], [1], [0, 0, 1, 1], [], []>} : vector<8x8xbf16>, vector<8x32xbf16>, vector<8x32xf32> -> vector<8x32xf32>
    %79 = arith.addf %60, %78 : vector<8x32xf32>
    %80 = vector.extract_strided_slice %19 {offsets = [0, 24], sizes = [8, 8], strides = [1, 1]} : vector<8x32xbf16> to vector<8x8xbf16>
    %81 = vector.extract_strided_slice %20 {offsets = [0, 24], sizes = [8, 8], strides = [1, 1]} : vector<8x32xbf16> to vector<8x8xbf16>
    %cst_29 = arith.constant dense<0.000000e+00> : vector<8x8xf32>
    %82 = tpu.matmul %80, %81, %cst_29 {dimension_numbers = #tpu.dot_dimension_numbers<[1], [1], [0], [0], [0, 0, 1, 0], [], []>} : vector<8x8xbf16>, vector<8x8xbf16>, vector<8x8xf32> -> vector<8x8xf32>
    %cst_30 = arith.constant -1.000000e+04 : f32
    %83 = vector.broadcast %cst_30 : f32 to vector<8x8xf32>
    %84 = arith.select %5, %82, %83 : vector<8x8xi1>, vector<8x8xf32>
    %cst_31 = arith.constant dense<0xFF800000> : vector<8xf32>
    %85 = vector.multi_reduction <maximumf>, %84, %cst_31 [1] : vector<8x8xf32> to vector<8xf32>
    %86 = vector.shape_cast %85 : vector<8xf32> to vector<8x1xf32>
    %87 = vector.broadcast %86 : vector<8x1xf32> to vector<8x8xf32>
    %88 = arith.subf %84, %87 : vector<8x8xf32>
    %89 = math.exp %88 : vector<8x8xf32>
    %cst_32 = arith.constant dense<0.000000e+00> : vector<8xf32>
    %90 = vector.multi_reduction <add>, %89, %cst_32 [1] : vector<8x8xf32> to vector<8xf32>
    %91 = vector.shape_cast %90 : vector<8xf32> to vector<8x1xf32>
    %92 = tpu.reciprocal %91 {approx = true} : vector<8x1xf32> -> vector<8x1xf32>
    %93 = vector.broadcast %92 : vector<8x1xf32> to vector<8x8xf32>
    %94 = arith.mulf %89, %93 : vector<8x8xf32>
    %95 = arith.truncf %94 : vector<8x8xf32> to vector<8x8xbf16>
    %96 = vector.extract_strided_slice %21 {offsets = [0, 96], sizes = [8, 32], strides = [1, 1]} : vector<8x128xbf16> to vector<8x32xbf16>
    %cst_33 = arith.constant dense<0.000000e+00> : vector<8x32xf32>
    %97 = tpu.matmul %95, %96, %cst_33 {dimension_numbers = #tpu.dot_dimension_numbers<[1], [0], [0], [1], [0, 0, 1, 1], [], []>} : vector<8x8xbf16>, vector<8x32xbf16>, vector<8x32xf32> -> vector<8x32xf32>
    %98 = arith.addf %79, %97 : vector<8x32xf32>
    %99 = vector.extract_strided_slice %6 {offsets = [1, 0], sizes = [1, 32], strides = [1, 1]} : vector<8x32xf32> to vector<1x32xf32>
    %100 = vector.broadcast %99 : vector<1x32xf32> to vector<8x32xf32>
    %101 = arith.addf %98, %100 : vector<8x32xf32>
    %102 = arith.addf %101, %1 : vector<8x32xf32>
    %103 = vector.extract_strided_slice %6 {offsets = [2, 0], sizes = [1, 32], strides = [1, 1]} : vector<8x32xf32> to vector<1x32xf32>
    %104 = vector.extract_strided_slice %6 {offsets = [3, 0], sizes = [1, 32], strides = [1, 1]} : vector<8x32xf32> to vector<1x32xf32>
    %cst_34 = arith.constant dense<0.000000e+00> : vector<8xf32>
    %105 = vector.multi_reduction <add>, %102, %cst_34 [1] : vector<8x32xf32> to vector<8xf32>
    %106 = vector.shape_cast %105 : vector<8xf32> to vector<8x1xf32>
    %cst_35 = arith.constant 3.200000e+01 : f32
    %107 = vector.broadcast %cst_35 : f32 to vector<8x1xf32>
    %108 = arith.divf %106, %107 : vector<8x1xf32>
    %109 = vector.broadcast %108 : vector<8x1xf32> to vector<8x32xf32>
    %110 = arith.subf %102, %109 : vector<8x32xf32>
    %111 = arith.mulf %110, %110 : vector<8x32xf32>
    %cst_36 = arith.constant dense<0.000000e+00> : vector<8xf32>
    %112 = vector.multi_reduction <add>, %111, %cst_36 [1] : vector<8x32xf32> to vector<8xf32>
    %113 = vector.shape_cast %112 : vector<8xf32> to vector<8x1xf32>
    %cst_37 = arith.constant 3.200000e+01 : f32
    %114 = vector.broadcast %cst_37 : f32 to vector<8x1xf32>
    %115 = arith.divf %113, %114 : vector<8x1xf32>
    %116 = vector.broadcast %108 : vector<8x1xf32> to vector<8x32xf32>
    %117 = arith.subf %102, %116 : vector<8x32xf32>
    %cst_38 = arith.constant 9.99999996E-13 : f32
    %118 = vector.broadcast %cst_38 : f32 to vector<8x1xf32>
    %119 = arith.addf %115, %118 : vector<8x1xf32>
    %120 = math.rsqrt %119 : vector<8x1xf32>
    %121 = vector.broadcast %120 : vector<8x1xf32> to vector<8x32xf32>
    %122 = arith.mulf %117, %121 : vector<8x32xf32>
    %123 = vector.broadcast %103 : vector<1x32xf32> to vector<8x32xf32>
    %124 = arith.mulf %122, %123 : vector<8x32xf32>
    %125 = vector.broadcast %104 : vector<1x32xf32> to vector<8x32xf32>
    %126 = arith.addf %124, %125 : vector<8x32xf32>
    %127 = arith.truncf %126 : vector<8x32xf32> to vector<8x32xbf16>
    %c0_39 = arith.constant 0 : index
    %c0_40 = arith.constant 0 : index
    %128 = vector.load %arg5[%c0_39, %c0_40] : memref<32x64xbf16, #tpu.memory_space<vmem>>, vector<32x64xbf16>
    %cst_41 = arith.constant dense<0.000000e+00> : vector<8x64xf32>
    %129 = tpu.matmul %127, %128, %cst_41 {dimension_numbers = #tpu.dot_dimension_numbers<[1], [0], [0], [1], [0, 0, 1, 1], [], []>} : vector<8x32xbf16>, vector<32x64xbf16>, vector<8x64xf32> -> vector<8x64xf32>
    %c0_42 = arith.constant 0 : index
    %c0_43 = arith.constant 0 : index
    %130 = vector.load %arg6[%c0_42, %c0_43] : memref<1x64xf32, #tpu.memory_space<vmem>>, vector<1x64xf32>
    %131 = vector.broadcast %130 : vector<1x64xf32> to vector<8x64xf32>
    %132 = arith.addf %129, %131 : vector<8x64xf32>
    %cst_44 = arith.constant 0.000000e+00 : f32
    %133 = vector.broadcast %cst_44 : f32 to vector<8x64xf32>
    %134 = arith.maximumf %132, %133 : vector<8x64xf32>
    %135 = arith.truncf %134 : vector<8x64xf32> to vector<8x64xbf16>
    %c0_45 = arith.constant 0 : index
    %c0_46 = arith.constant 0 : index
    %136 = vector.load %arg7[%c0_45, %c0_46] : memref<64x32xbf16, #tpu.memory_space<vmem>>, vector<64x32xbf16>
    %cst_47 = arith.constant dense<0.000000e+00> : vector<8x32xf32>
    %137 = tpu.matmul %135, %136, %cst_47 {dimension_numbers = #tpu.dot_dimension_numbers<[1], [0], [0], [1], [0, 0, 1, 1], [], []>} : vector<8x64xbf16>, vector<64x32xbf16>, vector<8x32xf32> -> vector<8x32xf32>
    %138 = vector.extract_strided_slice %6 {offsets = [4, 0], sizes = [1, 32], strides = [1, 1]} : vector<8x32xf32> to vector<1x32xf32>
    %139 = vector.broadcast %138 : vector<1x32xf32> to vector<8x32xf32>
    %140 = arith.addf %137, %139 : vector<8x32xf32>
    %141 = arith.addf %140, %126 : vector<8x32xf32>
    %142 = vector.extract_strided_slice %6 {offsets = [5, 0], sizes = [1, 32], strides = [1, 1]} : vector<8x32xf32> to vector<1x32xf32>
    %143 = vector.extract_strided_slice %6 {offsets = [6, 0], sizes = [1, 32], strides = [1, 1]} : vector<8x32xf32> to vector<1x32xf32>
    %cst_48 = arith.constant dense<0.000000e+00> : vector<8xf32>
    %144 = vector.multi_reduction <add>, %141, %cst_48 [1] : vector<8x32xf32> to vector<8xf32>
    %145 = vector.shape_cast %144 : vector<8xf32> to vector<8x1xf32>
    %cst_49 = arith.constant 3.200000e+01 : f32
    %146 = vector.broadcast %cst_49 : f32 to vector<8x1xf32>
    %147 = arith.divf %145, %146 : vector<8x1xf32>
    %148 = vector.broadcast %147 : vector<8x1xf32> to vector<8x32xf32>
    %149 = arith.subf %141, %148 : vector<8x32xf32>
    %150 = arith.mulf %149, %149 : vector<8x32xf32>
    %cst_50 = arith.constant dense<0.000000e+00> : vector<8xf32>
    %151 = vector.multi_reduction <add>, %150, %cst_50 [1] : vector<8x32xf32> to vector<8xf32>
    %152 = vector.shape_cast %151 : vector<8xf32> to vector<8x1xf32>
    %cst_51 = arith.constant 3.200000e+01 : f32
    %153 = vector.broadcast %cst_51 : f32 to vector<8x1xf32>
    %154 = arith.divf %152, %153 : vector<8x1xf32>
    %155 = vector.broadcast %147 : vector<8x1xf32> to vector<8x32xf32>
    %156 = arith.subf %141, %155 : vector<8x32xf32>
    %cst_52 = arith.constant 9.99999996E-13 : f32
    %157 = vector.broadcast %cst_52 : f32 to vector<8x1xf32>
    %158 = arith.addf %154, %157 : vector<8x1xf32>
    %159 = math.rsqrt %158 : vector<8x1xf32>
    %160 = vector.broadcast %159 : vector<8x1xf32> to vector<8x32xf32>
    %161 = arith.mulf %156, %160 : vector<8x32xf32>
    %162 = vector.broadcast %142 : vector<1x32xf32> to vector<8x32xf32>
    %163 = arith.mulf %161, %162 : vector<8x32xf32>
    %164 = vector.broadcast %143 : vector<1x32xf32> to vector<8x32xf32>
    %165 = arith.addf %163, %164 : vector<8x32xf32>
    %c0_53 = arith.constant 0 : index
    %c0_54 = arith.constant 0 : index
    %c0_55 = arith.constant 0 : index
    %166 = vector.load %arg9[%c0_53, %c0_54, %c0_55] : memref<1x8x32xf32, #tpu.memory_space<vmem>>, vector<1x8x32xf32>
    %167 = vector.shape_cast %166 : vector<1x8x32xf32> to vector<8x32xf32>
    %168 = vector.shape_cast %165 : vector<8x32xf32> to vector<1x8x32xf32>
    tpu.vector_store %arg9[%c0_53, %c0_54, %c0_55], %168 {strides = array<i32>} : memref<1x8x32xf32, #tpu.memory_space<vmem>>, vector<1x8x32xf32>,
    return
  }
  func.func @transform_0(%arg0: i32) -> (i32, i32, i32) {
    %c0_i32 = arith.constant 0 : i32
    %c0_i32_0 = arith.constant 0 : i32
    %c0_i32_1 = arith.constant 0 : i32
    return %arg0, %c0_i32, %c0_i32_0 : i32, i32, i32
  }
  func.func @transform_1(%arg0: i32) -> (i32, i32, i32) {
    %c0_i32 = arith.constant 0 : i32
    %c0_i32_0 = arith.constant 0 : i32
    %c0_i32_1 = arith.constant 0 : i32
    return %arg0, %c0_i32, %c0_i32_0 : i32, i32, i32
  }
  func.func @transform_2(%arg0: i32) -> (i32, i32) {
    %c0_i32 = arith.constant 0 : i32
    %c0_i32_0 = arith.constant 0 : i32
    %c0_i32_1 = arith.constant 0 : i32
    return %c0_i32, %c0_i32_0 : i32, i32
  }
  func.func @transform_3(%arg0: i32) -> (i32, i32) {
    %c0_i32 = arith.constant 0 : i32
    %c0_i32_0 = arith.constant 0 : i32
    %c0_i32_1 = arith.constant 0 : i32
    return %c0_i32, %c0_i32_0 : i32, i32
  }
  func.func @transform_4(%arg0: i32) -> (i32, i32) {
    %c0_i32 = arith.constant 0 : i32
    %c0_i32_0 = arith.constant 0 : i32
    %c0_i32_1 = arith.constant 0 : i32
    return %c0_i32, %c0_i32_0 : i32, i32
  }
  func.func @transform_5(%arg0: i32) -> (i32, i32) {
    %c0_i32 = arith.constant 0 : i32
    %c0_i32_0 = arith.constant 0 : i32
    %c0_i32_1 = arith.constant 0 : i32
    return %c0_i32, %c0_i32_0 : i32, i32
  }
  func.func @transform_6(%arg0: i32) -> (i32, i32) {
    %c0_i32 = arith.constant 0 : i32
    %c0_i32_0 = arith.constant 0 : i32
    %c0_i32_1 = arith.constant 0 : i32
    return %c0_i32, %c0_i32_0 : i32, i32
  }
  func.func @transform_7(%arg0: i32) -> (i32, i32) {
    %c0_i32 = arith.constant 0 : i32
    %c0_i32_0 = arith.constant 0 : i32
    %c0_i32_1 = arith.constant 0 : i32
    return %c0_i32, %c0_i32_0 : i32, i32
  }
  func.func @transform_8(%arg0: i32) -> (i32, i32, i32) {
    %c0_i32 = arith.constant 0 : i32
    %c0_i32_0 = arith.constant 0 : i32
    %c0_i32_1 = arith.constant 0 : i32
    return %arg0, %c0_i32, %c0_i32_0 : i32, i32, i32
  }
}

</mosaic_0001>

<llo_original>
// kernel: encoder_layer.1
$region0: #{encoder_layer.1}
  #allocation0 [shape = 'u32[]', space=smem, size = 0x4, offset = 0x4, fixed_abs, tag = 'smem constant byte address 0x4 - core index']
  #allocation1 [shape = 'u32[144,128]{1,0:T(1,128)}', space=vmem, size = 0x12000, scoped, tag = 'internal scratch']
  %s0 = inlined_call_operand.vmem [shape: f32[2,8,32], index: 0, kind: input, shape index: {}]
  %s1 = inlined_call_operand.vmem [shape: s32[2,8,8], index: 1, kind: input, shape index: {}]
  %s2 = inlined_call_operand.vmem [shape: bf16[32,64], index: 2, kind: input, shape index: {}]
  %s3 = inlined_call_operand.vmem [shape: bf16[32,128], index: 3, kind: input, shape index: {}]
  %s4 = inlined_call_operand.vmem [shape: bf16[32,64], index: 4, kind: input, shape index: {}]
  %s5 = inlined_call_operand.vmem [shape: f32[1,64], index: 5, kind: input, shape index: {}]
  %s6 = inlined_call_operand.vmem [shape: bf16[64,32], index: 6, kind: input, shape index: {}]
  %s7 = inlined_call_operand.vmem [shape: f32[8,32], index: 7, kind: input, shape index: {}]
  %s8 = inlined_call_operand.hbm [shape: f32[2,8,32], index: 8, kind: output, shape index: {}]
  %s9 = sld [smem:[#allocation0]]
  $region65: #{encoder_layer.1} parent=0
    _
  %s11 = ssub.s32 1, %s9
  %s12 = scalar_select 0, %s11, %s9
  $region1: #{encoder_layer.1} parent=0
    #allocation2 [shape = 'u8[8192]{0}', space=vmem, size = 0x2000, scoped, tag = 'output window, operand 0']
    #allocation3 [shape = 's32[2]{0}', space=sflag, size = 0x8, scoped, tag = 'scoped memory for encoder_layer.1']
    %13 = vsyncpa [#allocation3], 0
    %s14 = scalar_lea.sflag [#allocation3], 1
    %15 = vsyncpa %s14, 0
    loop: start=0, step=1, limit=4
    $region2: #{encoder_layer.1} parent=1 // loop_pre_header
      _
    $region3: #{encoder_layer.1} parent=1 // loop_header
      %s17 = sphi 0, %s21
      %p18 = scmp.ge.s32.totalorder %s17, 4
      %s27 = sphi 0, %s29
      %s30 = sphi 0, %s27
      %s31 = sphi 0, %s30
      %s47 = sphi 0, %s31
      %s53 = sphi 0, %s55
      %s56 = sphi 0, %s53
      %s57 = sphi 0, %s56
      %s73 = sphi 0, %s57
      %s77 = sphi 0, %s77
      %s79 = sphi 0, %s77
      %s80 = sphi 0, %s79
      %s94 = sphi 0, %s80
      %s98 = sphi 0, %s98
      %s100 = sphi 0, %s98
      %s101 = sphi 0, %s100
      %s115 = sphi 0, %s101
      %s119 = sphi 0, %s119
      %s121 = sphi 0, %s119
      %s122 = sphi 0, %s121
      %s136 = sphi 0, %s122
      %s140 = sphi 0, %s140
      %s142 = sphi 0, %s140
      %s143 = sphi 0, %s142
      %s157 = sphi 0, %s143
      %s161 = sphi 0, %s161
      %s163 = sphi 0, %s161
      %s164 = sphi 0, %s163
      %s178 = sphi 0, %s164
      %s182 = sphi 0, %s182
      %s184 = sphi 0, %s182
      %s185 = sphi 0, %s184
      %s199 = sphi 0, %s185
      %s205 = sphi 0, %s207
      %s208 = sphi 0, %s205
      %s209 = sphi 0, %s208
      %s225 = sphi 0, %s209
    $region4: #{encoder_layer.1} parent=1 // loop_header_branch
      %20 = sbr.rel (%p18) target = $region8
    $region5: #{encoder_layer.1} parent=1 // loop_body
      %s22 = ssub.s32 %s17, 1
      %s23 = ssub.s32 %s17, 2
      %s24 = sadd.s32 %s17, 1
      %s25 = ssub.s32 %s17, %s24
      %p26 = scmp.eq.s32.totalorder %s25, 0
      %s28 = sadd.s32 %s27, 1
      %s29 = scalar_select %p26, %s27, %s28
      %p32 = pneg %p26
      %p33 = scmp.eq.s32.totalorder %s17, 1
      %p34 = por %p32, %p33
      %p35 = scmp.ne.s32.totalorder %s27, %s30
      %p36 = scmp.eq.s32.totalorder %s17, 0
      %p37 = por %p35, %p36
      %p38 = scmp.ne.s32.totalorder %s27, %s30
      %p39 = scmp.eq.s32.totalorder %s22, 1
      %p40 = por %p38, %p39
      %p41 = scmp.ne.s32.totalorder %s30, %s31
      %p42 = scmp.eq.s32.totalorder %s22, 0
      %p43 = por %p41, %p42
      %p44 = scmp.ne.s32.totalorder %s30, %s31
      %p45 = scmp.eq.s32.totalorder %s23, 1
      %p46 = por %p44, %p45
      %p48 = scmp.ne.s32.totalorder %s31, %s47
      %p49 = scmp.eq.s32.totalorder %s23, 0
      %p50 = por %p48, %p49
      %s51 = ssub.s32 %s17, %s24
      %p52 = scmp.eq.s32.totalorder %s51, 0
      %s54 = sadd.s32 %s53, 1
      %s55 = scalar_select %p52, %s53, %s54
      %p58 = pneg %p52
      %p59 = scmp.eq.s32.totalorder %s17, 1
      %p60 = por %p58, %p59
      %p61 = scmp.ne.s32.totalorder %s53, %s56
      %p62 = scmp.eq.s32.totalorder %s17, 0
      %p63 = por %p61, %p62
      %p64 = scmp.ne.s32.totalorder %s53, %s56
      %p65 = scmp.eq.s32.totalorder %s22, 1
      %p66 = por %p64, %p65
      %p67 = scmp.ne.s32.totalorder %s56, %s57
      %p68 = scmp.eq.s32.totalorder %s22, 0
      %p69 = por %p67, %p68
      %p70 = scmp.ne.s32.totalorder %s56, %s57
      %p71 = scmp.eq.s32.totalorder %s23, 1
      %p72 = por %p70, %p71
      %p74 = scmp.ne.s32.totalorder %s57, %s73
      %p75 = scmp.eq.s32.totalorder %s23, 0
      %p76 = por %p74, %p75
      %s78 = sadd.s32 %s77, 1
      %p81 = scmp.eq.s32.totalorder %s17, 1
      %p82 = scmp.ne.s32.totalorder %s77, %s79
      %p83 = scmp.eq.s32.totalorder %s17, 0
      %p84 = por %p82, %p83
      %p85 = scmp.ne.s32.totalorder %s77, %s79
      %p86 = scmp.eq.s32.totalorder %s22, 1
      %p87 = por %p85, %p86
      %p88 = scmp.ne.s32.totalorder %s79, %s80
      %p89 = scmp.eq.s32.totalorder %s22, 0
      %p90 = por %p88, %p89
      %p91 = scmp.ne.s32.totalorder %s79, %s80
      %p92 = scmp.eq.s32.totalorder %s23, 1
      %p93 = por %p91, %p92
      %p95 = scmp.ne.s32.totalorder %s80, %s94
      %p96 = scmp.eq.s32.totalorder %s23, 0
      %p97 = por %p95, %p96
      %s99 = sadd.s32 %s98, 1
      %p102 = scmp.eq.s32.totalorder %s17, 1
      %p103 = scmp.ne.s32.totalorder %s98, %s100
      %p104 = scmp.eq.s32.totalorder %s17, 0
      %p105 = por %p103, %p104
      %p106 = scmp.ne.s32.totalorder %s98, %s100
      %p107 = scmp.eq.s32.totalorder %s22, 1
      %p108 = por %p106, %p107
      %p109 = scmp.ne.s32.totalorder %s100, %s101
      %p110 = scmp.eq.s32.totalorder %s22, 0
      %p111 = por %p109, %p110
      %p112 = scmp.ne.s32.totalorder %s100, %s101
      %p113 = scmp.eq.s32.totalorder %s23, 1
      %p114 = por %p112, %p113
      %p116 = scmp.ne.s32.totalorder %s101, %s115
      %p117 = scmp.eq.s32.totalorder %s23, 0
      %p118 = por %p116, %p117
      %s120 = sadd.s32 %s119, 1
      %p123 = scmp.eq.s32.totalorder %s17, 1
      %p124 = scmp.ne.s32.totalorder %s119, %s121
      %p125 = scmp.eq.s32.totalorder %s17, 0
      %p126 = por %p124, %p125
      %p127 = scmp.ne.s32.totalorder %s119, %s121
      %p128 = scmp.eq.s32.totalorder %s22, 1
      %p129 = por %p127, %p128
      %p130 = scmp.ne.s32.totalorder %s121, %s122
      %p131 = scmp.eq.s32.totalorder %s22, 0
      %p132 = por %p130, %p131
      %p133 = scmp.ne.s32.totalorder %s121, %s122
      %p134 = scmp.eq.s32.totalorder %s23, 1
      %p135 = por %p133, %p134
      %p137 = scmp.ne.s32.totalorder %s122, %s136
      %p138 = scmp.eq.s32.totalorder %s23, 0
      %p139 = por %p137, %p138
      %s141 = sadd.s32 %s140, 1
      %p144 = scmp.eq.s32.totalorder %s17, 1
      %p145 = scmp.ne.s32.totalorder %s140, %s142
      %p146 = scmp.eq.s32.totalorder %s17, 0
      %p147 = por %p145, %p146
      %p148 = scmp.ne.s32.totalorder %s140, %s142
      %p149 = scmp.eq.s32.totalorder %s22, 1
      %p150 = por %p148, %p149
      %p151 = scmp.ne.s32.totalorder %s142, %s143
      %p152 = scmp.eq.s32.totalorder %s22, 0
      %p153 = por %p151, %p152
      %p154 = scmp.ne.s32.totalorder %s142, %s143
      %p155 = scmp.eq.s32.totalorder %s23, 1
      %p156 = por %p154, %p155
      %p158 = scmp.ne.s32.totalorder %s143, %s157
      %p159 = scmp.eq.s32.totalorder %s23, 0
      %p160 = por %p158, %p159
      %s162 = sadd.s32 %s161, 1
      %p165 = scmp.eq.s32.totalorder %s17, 1
      %p166 = scmp.ne.s32.totalorder %s161, %s163
      %p167 = scmp.eq.s32.totalorder %s17, 0
      %p168 = por %p166, %p167
      %p169 = scmp.ne.s32.totalorder %s161, %s163
      %p170 = scmp.eq.s32.totalorder %s22, 1
      %p171 = por %p169, %p170
      %p172 = scmp.ne.s32.totalorder %s163, %s164
      %p173 = scmp.eq.s32.totalorder %s22, 0
      %p174 = por %p172, %p173
      %p175 = scmp.ne.s32.totalorder %s163, %s164
      %p176 = scmp.eq.s32.totalorder %s23, 1
      %p177 = por %p175, %p176
      %p179 = scmp.ne.s32.totalorder %s164, %s178
      %p180 = scmp.eq.s32.totalorder %s23, 0
      %p181 = por %p179, %p180
      %s183 = sadd.s32 %s182, 1
      %p186 = scmp.eq.s32.totalorder %s17, 1
      %p187 = scmp.ne.s32.totalorder %s182, %s184
      %p188 = scmp.eq.s32.totalorder %s17, 0
      %p189 = por %p187, %p188
      %p190 = scmp.ne.s32.totalorder %s182, %s184
      %p191 = scmp.eq.s32.totalorder %s22, 1
      %p192 = por %p190, %p191
      %p193 = scmp.ne.s32.totalorder %s184, %s185
      %p194 = scmp.eq.s32.totalorder %s22, 0
      %p195 = por %p193, %p194
      %p196 = scmp.ne.s32.totalorder %s184, %s185
      %p197 = scmp.eq.s32.totalorder %s23, 1
      %p198 = por %p196, %p197
      %p200 = scmp.ne.s32.totalorder %s185, %s199
      %p201 = scmp.eq.s32.totalorder %s23, 0
      %p202 = por %p200, %p201
      %s203 = ssub.s32 %s17, %s24
      %p204 = scmp.eq.s32.totalorder %s203, 0
      %s206 = sadd.s32 %s205, 1
      %s207 = scalar_select %p204, %s205, %s206
      %p210 = pneg %p204
      %p211 = scmp.eq.s32.totalorder %s17, 1
      %p212 = por %p210, %p211
      %p213 = scmp.ne.s32.totalorder %s205, %s208
      %p214 = scmp.eq.s32.totalorder %s17, 0
      %p215 = por %p213, %p214
      %p216 = scmp.ne.s32.totalorder %s205, %s208
      %p217 = scmp.eq.s32.totalorder %s22, 1
      %p218 = por %p216, %p217
      %p219 = scmp.ne.s32.totalorder %s208, %s209
      %p220 = scmp.eq.s32.totalorder %s22, 0
      %p221 = por %p219, %p220
      %p222 = scmp.ne.s32.totalorder %s208, %s209
      %p223 = scmp.eq.s32.totalorder %s23, 1
      %p224 = por %p222, %p223
      %p226 = scmp.ne.s32.totalorder %s209, %s225
      %p227 = scmp.eq.s32.totalorder %s23, 0
      %p228 = por %p226, %p227
      %p229 = scmp.le.s32.totalorder 1, %s17
      %p230 = scmp.lt.s32.totalorder %s17, 3
      %p231 = pnand %p229, %p230
      %p232 = pneg %p231
      // Predicated region
      $region9: #{encoder_layer.1} parent=5 // pred_check
        _
      $region10: #{encoder_layer.1} parent=5 // pred_check_branch
        %234 = sbr.rel (%p231) target = $region12
      $region11: #{encoder_layer.1} parent=5 // pred_region
        %s235 = ssub.s32 %s17, 1
        // Predicated region
        $region13: #{encoder_layer.1} parent=11 // pred_check
          %p236 = pneg %p90
        $region14: #{encoder_layer.1} parent=11 // pred_check_branch
          %238 = sbr.rel (%p236) target = $region16
        $region15: #{encoder_layer.1} parent=11 // pred_region
          _
        $region16: #{encoder_layer.1} parent=11 // pred_fallthru
          _
        // Predicated region
        $region17: #{encoder_layer.1} parent=11 // pred_check
          %p239 = pneg %p111
        $region18: #{encoder_layer.1} parent=11 // pred_check_branch
          %241 = sbr.rel (%p239) target = $region20
        $region19: #{encoder_layer.1} parent=11 // pred_region
          _
        $region20: #{encoder_layer.1} parent=11 // pred_fallthru
          _
        // Predicated region
        $region21: #{encoder_layer.1} parent=11 // pred_check
          %p242 = pneg %p132
        $region22: #{encoder_layer.1} parent=11 // pred_check_branch
          %244 = sbr.rel (%p242) target = $region24
        $region23: #{encoder_layer.1} parent=11 // pred_region
          _
        $region24: #{encoder_layer.1} parent=11 // pred_fallthru
          _
        // Predicated region
        $region25: #{encoder_layer.1} parent=11 // pred_check
          %p245 = pneg %p153
        $region26: #{encoder_layer.1} parent=11 // pred_check_branch
          %247 = sbr.rel (%p245) target = $region28
        $region27: #{encoder_layer.1} parent=11 // pred_region
          _
        $region28: #{encoder_layer.1} parent=11 // pred_fallthru
          _
        // Predicated region
        $region29: #{encoder_layer.1} parent=11 // pred_check
          %p248 = pneg %p174
        $region30: #{encoder_layer.1} parent=11 // pred_check_branch
          %250 = sbr.rel (%p248) target = $region32
        $region31: #{encoder_layer.1} parent=11 // pred_region
          _
        $region32: #{encoder_layer.1} parent=11 // pred_fallthru
          _
        // Predicated region
        $region33: #{encoder_layer.1} parent=11 // pred_check
          %p251 = pneg %p195
        $region34: #{encoder_layer.1} parent=11 // pred_check_branch
          %253 = sbr.rel (%p251) target = $region36
        $region35: #{encoder_layer.1} parent=11 // pred_region
          _
        $region36: #{encoder_layer.1} parent=11 // pred_fallthru
          _
      $region12: #{encoder_layer.1} parent=5 // pred_fallthru
        _
      %p254 = scmp.lt.s32.totalorder %s17, 2
      // Predicated region
      $region37: #{encoder_layer.1} parent=5 // pred_check
        %p255 = pneg %p254
      $region38: #{encoder_layer.1} parent=5 // pred_check_branch
        %257 = sbr.rel (%p255) target = $region40
      $region39: #{encoder_layer.1} parent=5 // pred_region
        // Predicated region
        $region41: #{encoder_layer.1} parent=39 // pred_check
          %p258 = pneg %p37
        $region42: #{encoder_layer.1} parent=39 // pred_check_branch
          %260 = sbr.rel (%p258) target = $region44
        $region43: #{encoder_layer.1} parent=39 // pred_region
          %p261 = scmp.lt.s32.totalorder %s17, 1
          %s262 = scalar_select %p261, %s17, 1
          %s263 = smul.addr %s262, 8
          %s264 = scalar_lea.vmem %s0, %s263
        $region44: #{encoder_layer.1} parent=39 // pred_fallthru
          _
        // Predicated region
        $region45: #{encoder_layer.1} parent=39 // pred_check
          %p265 = pneg %p63
        $region46: #{encoder_layer.1} parent=39 // pred_check_branch
          %267 = sbr.rel (%p265) target = $region48
        $region47: #{encoder_layer.1} parent=39 // pred_region
          %p268 = scmp.lt.s32.totalorder %s17, 1
          %s269 = scalar_select %p268, %s17, 1
          %s270 = smul.addr %s269, 8
          %s271 = scalar_lea.vmem %s1, %s270
        $region48: #{encoder_layer.1} parent=39 // pred_fallthru
          _
      $region40: #{encoder_layer.1} parent=5 // pred_fallthru
        _
      %p272 = scmp.le.s32.totalorder 1, %s17
      %p273 = scmp.lt.s32.totalorder %s17, 3
      %p274 = pnand %p272, %p273
      %p275 = pneg %p274
      // Predicated region
      $region49: #{encoder_layer.1} parent=5 // pred_check
        _
      $region50: #{encoder_layer.1} parent=5 // pred_check_branch
        %277 = sbr.rel (%p274) target = $region52
      $region51: #{encoder_layer.1} parent=5 // pred_region
        %s278 = ssub.s32 %s17, 1
        %p279 = scmp.lt.s32.totalorder %s22, 1
        %s280 = scalar_select %p279, %s22, 1
        %s281 = smul.addr %s280, 8
        %s282 = scalar_lea.vmem %s0, %s281
        %p283 = pneg %p43
        %p284 = pneg %p40
        %p285 = scmp.lt.s32.totalorder %s22, 1
        %s286 = scalar_select %p285, %s22, 1
        %s287 = smul.addr %s286, 8
        %s288 = scalar_lea.vmem %s1, %s287
        %p289 = pneg %p69
        %p290 = pneg %p66
        %p291 = pneg %p90
        %p292 = pneg %p87
        %p293 = pneg %p111
        %p294 = pneg %p108
        %p295 = pneg %p132
        %p296 = pneg %p129
        %p297 = pneg %p153
        %p298 = pneg %p150
        %p299 = pneg %p174
        %p300 = pneg %p171
        %p301 = pneg %p195
        %p302 = pneg %p192
        %p303 = pneg %p221
        %p304 = pneg %p218
        %s305 = sand.u32 %s208, 1
        %s306 = scalar_lea.sflag [#allocation3], %s305
        %s307 = sand.u32 %s208, 1
        %s308 = smul.addr %s307, 8
        %s309 = scalar_lea.vmem [#allocation2], %s308
        %p310 = scmp.lt.s32.totalorder %s22, 1
        %s311 = scalar_select %p310, %s22, 1
        %s312 = smul.addr %s311, 8
        %s313 = scalar_lea.vmem %s0, %s312
        %p314 = scmp.lt.s32.totalorder %s22, 1
        %s315 = scalar_select %p314, %s22, 1
        %s316 = smul.addr %s315, 8
        %s317 = scalar_lea.vmem %s1, %s316
        %v319 = vld [vmem:[%s313] sm:$0xff]
        %v320 = vld [vmem:[%s317] sm:$0xff]
        %vm321 = vcmp.ne.s32.totalorder %v320, 0
        %v322 = vld [vmem:[%s7] sm:$0xff]
        %v323 = vpack.c.bf16 %v319, %v319
        %v324 = vld [vmem:[%s2] sm:$0xf]
        %v325 = vld [vmem:[%s2 + $0x4] sm:$0xf]
        %v326 = vld [vmem:[%s2 + $0x8] sm:$0xf]
        %v327 = vld [vmem:[%s2 + $0xc] sm:$0xf]
        %v332 = vunpack.c.l.b16 %v324
        %v333 = vunpack.c.l.b16 %v325
        %v334 = vunpack.c.l.b16 %v326
        %v335 = vunpack.c.l.b16 %v327
        %v336 = vpack.c.b16 %v333, %v332
        %v337 = vpack.c.b16 %v335, %v334
        %vm340 = vcmask 261120
        %v342 = vsel %vm340, %v323, 0
        %344 = vmatprep.subr.bf16.mxu0 0
        %345 = vmatpush1.bf16.msra.mxu0 %v336
        %346 = vmatprep.subr.bf16.mxu0 0
        %347 = vmatpush1.bf16.msra.mxu0 %v337
        %348 = vmatprep.subr.bf16.mxu0 0
        %349 = vmatpush1.bf16.msra.mxu0 0
        %350 = vmatprep.subr.bf16.mxu0 0
        %351 = vmatpush1.bf16.msra.mxu0 0
        %352 = vmatprep.subr.bf16.mxu0 0
        %353 = vmatpush1.bf16.msra.mxu0 0
        %354 = vmatprep.subr.bf16.mxu0 0
        %355 = vmatpush1.bf16.msra.mxu0 0
        %356 = vmatprep.subr.bf16.mxu0 0
        %357 = vmatpush1.bf16.msra.mxu0 0
        %358 = vmatprep.subr.bf16.mxu0 0
        %359 = vmatpush1.bf16.msra.mxu0 0
        %360 = vmatprep.subr.bf16.mxu0 0
        %361 = vmatpush1.bf16.msra.mxu0 0
        %362 = vmatprep.subr.bf16.mxu0 0
        %363 = vmatpush1.bf16.msra.mxu0 0
        %364 = vmatprep.subr.bf16.mxu0 0
        %365 = vmatpush1.bf16.msra.mxu0 0
        %366 = vmatprep.subr.bf16.mxu0 0
        %367 = vmatpush1.bf16.msra.mxu0 0
        %368 = vmatprep.subr.bf16.mxu0 0
        %369 = vmatpush1.bf16.msra.mxu0 0
        %370 = vmatprep.subr.bf16.mxu0 0
        %371 = vmatpush1.bf16.msra.mxu0 0
        %372 = vmatprep.subr.bf16.mxu0 0
        %373 = vmatpush1.bf16.msra.mxu0 0
        %374 = vmatprep.subr.bf16.mxu0 0
        %375 = vmatpush1.bf16.msra.mxu0 0
        %376 = vmatprep.mubr.bf16.mxu0 0
        %377 = vmatmul.mubr.bf16.gmra.mrb[0].mxu0 %v342
        %v378 = vpop.f32.mrb[0].mxu0
        %v379 = vadd.f32 0.0, %v378
        %v380 = vpop.f32.mrb[0].mxu0
        %v381 = vpop.f32.mrb[0].mxu0
        %v382 = vpop.f32.mrb[0].mxu0
        %383 = vdwg.mxu0
        %v384 = vlaneseq
        %v385 = vshrl.u32 %v384, 7
        %v386 = vsub.s32 0, %v385
        %v387 = vrot.slane %v322, %v386
        %v388 = vadd.f32 %v379, %v387
        %v389 = vmul.f32 %v388, 0.35355338
        %v390 = vld [vmem:[%s3] sm:$0xf]
        %v391 = vld [vmem:[%s3 + $0x4] sm:$0xf]
        %v392 = vld [vmem:[%s3 + $0x8] sm:$0xf]
        %v393 = vld [vmem:[%s3 + $0xc] sm:$0xf]
        %v398 = vunpack.c.l.b16 %v390
        %v399 = vunpack.c.l.b16 %v391
        %v400 = vunpack.c.l.b16 %v392
        %v401 = vunpack.c.l.b16 %v393
        %v402 = vpack.c.b16 %v399, %v398
        %v403 = vpack.c.b16 %v401, %v400
        %406 = vmatprep.subr.bf16.mxu0 0
        %407 = vmatpush1.bf16.msra.mxu0 %v402
        %408 = vmatprep.subr.bf16.mxu0 0
        %409 = vmatpush1.bf16.msra.mxu0 %v403
        %410 = vmatprep.subr.bf16.mxu0 0
        %411 = vmatpush1.bf16.msra.mxu0 0
        %412 = vmatprep.subr.bf16.mxu0 0
        %413 = vmatpush1.bf16.msra.mxu0 0
        %414 = vmatprep.subr.bf16.mxu0 0
        %415 = vmatpush1.bf16.msra.mxu0 0
        %416 = vmatprep.subr.bf16.mxu0 0
        %417 = vmatpush1.bf16.msra.mxu0 0
        %418 = vmatprep.subr.bf16.mxu0 0
        %419 = vmatpush1.bf16.msra.mxu0 0
        %420 = vmatprep.subr.bf16.mxu0 0
        %421 = vmatpush1.bf16.msra.mxu0 0
        %422 = vmatprep.subr.bf16.mxu0 0
        %423 = vmatpush1.bf16.msra.mxu0 0
        %424 = vmatprep.subr.bf16.mxu0 0
        %425 = vmatpush1.bf16.msra.mxu0 0
        %426 = vmatprep.subr.bf16.mxu0 0
        %427 = vmatpush1.bf16.msra.mxu0 0
        %428 = vmatprep.subr.bf16.mxu0 0
        %429 = vmatpush1.bf16.msra.mxu0 0
        %430 = vmatprep.subr.bf16.mxu0 0
        %431 = vmatpush1.bf16.msra.mxu0 0
        %432 = vmatprep.subr.bf16.mxu0 0
        %433 = vmatpush1.bf16.msra.mxu0 0
        %434 = vmatprep.subr.bf16.mxu0 0
        %435 = vmatpush1.bf16.msra.mxu0 0
        %436 = vmatprep.subr.bf16.mxu0 0
        %437 = vmatpush1.bf16.msra.mxu0 0
        %438 = vmatprep.mubr.bf16.mxu0 0
        %439 = vmatmul.mubr.bf16.gmra.mrb[0].mxu0 %v342
        %v440 = vpop.f32.mrb[0].mxu0
        %v441 = vadd.f32 0.0, %v440
        %v442 = vpop.f32.mrb[0].mxu0
        %v443 = vpop.f32.mrb[0].mxu0
        %v444 = vpop.f32.mrb[0].mxu0
        %445 = vdwg.mxu0
        %v446 = vpack.c.bf16 %v389, %v389
        %v447 = vpack.c.bf16 %v379, %v379
        %v448 = vpack.c.bf16 %v441, %v441
        %450 = vrot.lane.b32.xlu0 %v447, 96
        %v451 = vpop.permute.xlu0 %450
        %vm452 = vcmask 64512
        %v454 = vsel %vm452, %v446, 0
        %v457 = vsel %vm452, %v451, 0
        %459 = vmatprep.subr.bf16.mxu0 0
        %460 = vmatpush1.bf16.xpose.msra.mxu0 %v457
        %461 = vmatprep.subr.bf16.mxu0 0
        %462 = vmatpush1.bf16.xpose.msra.mxu0 0
        %463 = vmatprep.subr.bf16.mxu0 0
        %464 = vmatpush1.bf16.xpose.msra.mxu0 0
        %465 = vmatprep.subr.bf16.mxu0 0
        %466 = vmatpush1.bf16.xpose.msra.mxu0 0
        %467 = vmatprep.subr.bf16.mxu0 0
        %468 = vmatpush1.bf16.xpose.msra.mxu0 0
        %469 = vmatprep.subr.bf16.mxu0 0
        %470 = vmatpush1.bf16.xpose.msra.mxu0 0
        %471 = vmatprep.subr.bf16.mxu0 0
        %472 = vmatpush1.bf16.xpose.msra.mxu0 0
        %473 = vmatprep.subr.bf16.mxu0 0
        %474 = vmatpush1.bf16.xpose.msra.mxu0 0
        %475 = vmatprep.subr.bf16.mxu0 0
        %476 = vmatpush1.bf16.xpose.msra.mxu0 0
        %477 = vmatprep.subr.bf16.mxu0 0
        %478 = vmatpush1.bf16.xpose.msra.mxu0 0
        %479 = vmatprep.subr.bf16.mxu0 0
        %480 = vmatpush1.bf16.xpose.msra.mxu0 0
        %481 = vmatprep.subr.bf16.mxu0 0
        %482 = vmatpush1.bf16.xpose.msra.mxu0 0
        %483 = vmatprep.subr.bf16.mxu0 0
        %484 = vmatpush1.bf16.xpose.msra.mxu0 0
        %485 = vmatprep.subr.bf16.mxu0 0
        %486 = vmatpush1.bf16.xpose.msra.mxu0 0
        %487 = vmatprep.subr.bf16.mxu0 0
        %488 = vmatpush1.bf16.xpose.msra.mxu0 0
        %489 = vmatprep.subr.bf16.mxu0 0
        %490 = vmatpush1.bf16.xpose.msra.mxu0 0
        %491 = vmatprep.mubr.bf16.mxu0 0
        %492 = vmatmul.mubr.bf16.gmra.mrb[0].mxu0 %v454
        %v493 = vpop.f32.mrb[0].mxu0
        %v494 = vadd.f32 0.0, %v493
        %v495 = vpop.f32.mrb[0].mxu0
        %v496 = vpop.f32.mrb[0].mxu0
        %v497 = vpop.f32.mrb[0].mxu0
        %498 = vdwg.mxu0
        %v499 = vsel %vm321, %v494, -10000.0
        %v500 = vsel %vm452, %v499, -inf
        %501 = vmax.xlane.f32.xlu0 %v500
        %v502 = vpop.xlane.xlu0 %501
        %v503 = vsub.f32 %v499, %v502
        %v504 = vmul.f32 %v503, 1.442695
        %v505 = vpow.pop %v504
        %v506 = vsel %vm452, %v505, 0.0
        %507 = vadd.xlane.f32.xlu0 %v506
        %v508 = vpop.xlane.xlu0 %507
        %v509 = vrcp.pop %v508
        %v510 = vmul.f32 %v505, %v509
        %v511 = vpack.c.bf16 %v510, %v510
        %513 = vrot.lane.b32.xlu0 %v446, 120
        %v514 = vpop.permute.xlu0 %513
        %515 = vrot.lane.b32.xlu0 %v447, 88
        %v516 = vpop.permute.xlu0 %515
        %v518 = vsel %vm452, %v514, 0
        %v521 = vsel %vm452, %v516, 0
        %523 = vmatprep.subr.bf16.mxu0 0
        %524 = vmatpush1.bf16.xpose.msra.mxu0 %v521
        %525 = vmatprep.subr.bf16.mxu0 0
        %526 = vmatpush1.bf16.xpose.msra.mxu0 0
        %527 = vmatprep.subr.bf16.mxu0 0
        %528 = vmatpush1.bf16.xpose.msra.mxu0 0
        %529 = vmatprep.subr.bf16.mxu0 0
        %530 = vmatpush1.bf16.xpose.msra.mxu0 0
        %531 = vmatprep.subr.bf16.mxu0 0
        %532 = vmatpush1.bf16.xpose.msra.mxu0 0
        %533 = vmatprep.subr.bf16.mxu0 0
        %534 = vmatpush1.bf16.xpose.msra.mxu0 0
        %535 = vmatprep.subr.bf16.mxu0 0
        %536 = vmatpush1.bf16.xpose.msra.mxu0 0
        %537 = vmatprep.subr.bf16.mxu0 0
        %538 = vmatpush1.bf16.xpose.msra.mxu0 0
        %539 = vmatprep.subr.bf16.mxu0 0
        %540 = vmatpush1.bf16.xpose.msra.mxu0 0
        %541 = vmatprep.subr.bf16.mxu0 0
        %542 = vmatpush1.bf16.xpose.msra.mxu0 0
        %543 = vmatprep.subr.bf16.mxu0 0
        %544 = vmatpush1.bf16.xpose.msra.mxu0 0
        %545 = vmatprep.subr.bf16.mxu0 0
        %546 = vmatpush1.bf16.xpose.msra.mxu0 0
        %547 = vmatprep.subr.bf16.mxu0 0
        %548 = vmatpush1.bf16.xpose.msra.mxu0 0
        %549 = vmatprep.subr.bf16.mxu0 0
        %550 = vmatpush1.bf16.xpose.msra.mxu0 0
        %551 = vmatprep.subr.bf16.mxu0 0
        %552 = vmatpush1.bf16.xpose.msra.mxu0 0
        %553 = vmatprep.subr.bf16.mxu0 0
        %554 = vmatpush1.bf16.xpose.msra.mxu0 0
        %555 = vmatprep.mubr.bf16.mxu0 0
        %556 = vmatmul.mubr.bf16.gmra.mrb[0].mxu0 %v518
        %v557 = vpop.f32.mrb[0].mxu0
        %v558 = vadd.f32 0.0, %v557
        %v559 = vpop.f32.mrb[0].mxu0
        %v560 = vpop.f32.mrb[0].mxu0
        %v561 = vpop.f32.mrb[0].mxu0
        %562 = vdwg.mxu0
        %v563 = vsel %vm321, %v558, -10000.0
        %v564 = vsel %vm452, %v563, -inf
        %565 = vmax.xlane.f32.xlu0 %v564
        %v566 = vpop.xlane.xlu0 %565
        %v567 = vsub.f32 %v563, %v566
        %v568 = vmul.f32 %v567, 1.442695
        %v569 = vpow.pop %v568
        %v570 = vsel %vm452, %v569, 0.0
        %571 = vadd.xlane.f32.xlu0 %v570
        %v572 = vpop.xlane.xlu0 %571
        %v573 = vrcp.pop %v572
        %v574 = vmul.f32 %v569, %v573
        %v575 = vpack.c.bf16 %v574, %v574
        %577 = vrot.lane.b32.xlu0 %v448, 96
        %v578 = vpop.permute.xlu0 %577
        %v580 = vsel %vm452, %v575, 0
        %vm582 = vcmask 1043456
        %v584 = vsel %vm582, %v578, 0
        %586 = vmatprep.subr.bf16.mxu0 0
        %587 = vmatpush1.bf16.msra.mxu0 %v584
        %588 = vmatprep.subr.bf16.mxu0 0
        %589 = vmatpush1.bf16.msra.mxu0 0
        %590 = vmatprep.subr.bf16.mxu0 0
        %591 = vmatpush1.bf16.msra.mxu0 0
        %592 = vmatprep.subr.bf16.mxu0 0
        %593 = vmatpush1.bf16.msra.mxu0 0
        %594 = vmatprep.subr.bf16.mxu0 0
        %595 = vmatpush1.bf16.msra.mxu0 0
        %596 = vmatprep.subr.bf16.mxu0 0
        %597 = vmatpush1.bf16.msra.mxu0 0
        %598 = vmatprep.subr.bf16.mxu0 0
        %599 = vmatpush1.bf16.msra.mxu0 0
        %600 = vmatprep.subr.bf16.mxu0 0
        %601 = vmatpush1.bf16.msra.mxu0 0
        %602 = vmatprep.subr.bf16.mxu0 0
        %603 = vmatpush1.bf16.msra.mxu0 0
        %604 = vmatprep.subr.bf16.mxu0 0
        %605 = vmatpush1.bf16.msra.mxu0 0
        %606 = vmatprep.subr.bf16.mxu0 0
        %607 = vmatpush1.bf16.msra.mxu0 0
        %608 = vmatprep.subr.bf16.mxu0 0
        %609 = vmatpush1.bf16.msra.mxu0 0
        %610 = vmatprep.subr.bf16.mxu0 0
        %611 = vmatpush1.bf16.msra.mxu0 0
        %612 = vmatprep.subr.bf16.mxu0 0
        %613 = vmatpush1.bf16.msra.mxu0 0
        %614 = vmatprep.subr.bf16.mxu0 0
        %615 = vmatpush1.bf16.msra.mxu0 0
        %616 = vmatprep.subr.bf16.mxu0 0
        %617 = vmatpush1.bf16.msra.mxu0 0
        %618 = vmatprep.mubr.bf16.mxu0 0
        %619 = vmatmul.mubr.bf16.gmra.mrb[0].mxu0 %v580
        %v620 = vpop.f32.mrb[0].mxu0
        %v621 = vadd.f32 0.0, %v620
        %v622 = vpop.f32.mrb[0].mxu0
        %v623 = vpop.f32.mrb[0].mxu0
        %v624 = vpop.f32.mrb[0].mxu0
        %625 = vdwg.mxu0
        %v627 = vsel %vm452, %v511, 0
        %v630 = vsel %vm582, %v448, 0
        %632 = vmatprep.subr.bf16.mxu0 0
        %633 = vmatpush1.bf16.msra.mxu0 %v630
        %634 = vmatprep.subr.bf16.mxu0 0
        %635 = vmatpush1.bf16.msra.mxu0 0
        %636 = vmatprep.subr.bf16.mxu0 0
        %637 = vmatpush1.bf16.msra.mxu0 0
        %638 = vmatprep.subr.bf16.mxu0 0
        %639 = vmatpush1.bf16.msra.mxu0 0
        %640 = vmatprep.subr.bf16.mxu0 0
        %641 = vmatpush1.bf16.msra.mxu0 0
        %642 = vmatprep.subr.bf16.mxu0 0
        %643 = vmatpush1.bf16.msra.mxu0 0
        %644 = vmatprep.subr.bf16.mxu0 0
        %645 = vmatpush1.bf16.msra.mxu0 0
        %646 = vmatprep.subr.bf16.mxu0 0
        %647 = vmatpush1.bf16.msra.mxu0 0
        %648 = vmatprep.subr.bf16.mxu0 0
        %649 = vmatpush1.bf16.msra.mxu0 0
        %650 = vmatprep.subr.bf16.mxu0 0
        %651 = vmatpush1.bf16.msra.mxu0 0
        %652 = vmatprep.subr.bf16.mxu0 0
        %653 = vmatpush1.bf16.msra.mxu0 0
        %654 = vmatprep.subr.bf16.mxu0 0
        %655 = vmatpush1.bf16.msra.mxu0 0
        %656 = vmatprep.subr.bf16.mxu0 0
        %657 = vmatpush1.bf16.msra.mxu0 0
        %658 = vmatprep.subr.bf16.mxu0 0
        %659 = vmatpush1.bf16.msra.mxu0 0
        %660 = vmatprep.subr.bf16.mxu0 0
        %661 = vmatpush1.bf16.msra.mxu0 0
        %662 = vmatprep.subr.bf16.mxu0 0
        %663 = vmatpush1.bf16.msra.mxu0 0
        %664 = vmatprep.mubr.bf16.mxu0 0
        %665 = vmatmul.mubr.bf16.gmra.mrb[0].mxu0 %v627
        %v666 = vpop.f32.mrb[0].mxu0
        %v667 = vadd.f32 %v621, %v666
        %v668 = vpop.f32.mrb[0].mxu0
        %v669 = vpop.f32.mrb[0].mxu0
        %v670 = vpop.f32.mrb[0].mxu0
        %671 = vdwg.mxu0
        %672 = vrot.lane.b32.xlu0 %v446, 112
        %v673 = vpop.permute.xlu0 %672
        %674 = vrot.lane.b32.xlu0 %v447, 80
        %v675 = vpop.permute.xlu0 %674
        %v677 = vsel %vm452, %v673, 0
        %v680 = vsel %vm452, %v675, 0
        %682 = vmatprep.subr.bf16.mxu0 0
        %683 = vmatpush1.bf16.xpose.msra.mxu0 %v680
        %684 = vmatprep.subr.bf16.mxu0 0
        %685 = vmatpush1.bf16.xpose.msra.mxu0 0
        %686 = vmatprep.subr.bf16.mxu0 0
        %687 = vmatpush1.bf16.xpose.msra.mxu0 0
        %688 = vmatprep.subr.bf16.mxu0 0
        %689 = vmatpush1.bf16.xpose.msra.mxu0 0
        %690 = vmatprep.subr.bf16.mxu0 0
        %691 = vmatpush1.bf16.xpose.msra.mxu0 0
        %692 = vmatprep.subr.bf16.mxu0 0
        %693 = vmatpush1.bf16.xpose.msra.mxu0 0
        %694 = vmatprep.subr.bf16.mxu0 0
        %695 = vmatpush1.bf16.xpose.msra.mxu0 0
        %696 = vmatprep.subr.bf16.mxu0 0
        %697 = vmatpush1.bf16.xpose.msra.mxu0 0
        %698 = vmatprep.subr.bf16.mxu0 0
        %699 = vmatpush1.bf16.xpose.msra.mxu0 0
        %700 = vmatprep.subr.bf16.mxu0 0
        %701 = vmatpush1.bf16.xpose.msra.mxu0 0
        %702 = vmatprep.subr.bf16.mxu0 0
        %703 = vmatpush1.bf16.xpose.msra.mxu0 0
        %704 = vmatprep.subr.bf16.mxu0 0
        %705 = vmatpush1.bf16.xpose.msra.mxu0 0
        %706 = vmatprep.subr.bf16.mxu0 0
        %707 = vmatpush1.bf16.xpose.msra.mxu0 0
        %708 = vmatprep.subr.bf16.mxu0 0
        %709 = vmatpush1.bf16.xpose.msra.mxu0 0
        %710 = vmatprep.subr.bf16.mxu0 0
        %711 = vmatpush1.bf16.xpose.msra.mxu0 0
        %712 = vmatprep.subr.bf16.mxu0 0
        %713 = vmatpush1.bf16.xpose.msra.mxu0 0
        %714 = vmatprep.mubr.bf16.mxu0 0
        %715 = vmatmul.mubr.bf16.gmra.mrb[0].mxu0 %v677
        %v716 = vpop.f32.mrb[0].mxu0
        %v717 = vadd.f32 0.0, %v716
        %v718 = vpop.f32.mrb[0].mxu0
        %v719 = vpop.f32.mrb[0].mxu0
        %v720 = vpop.f32.mrb[0].mxu0
        %721 = vdwg.mxu0
        %v722 = vsel %vm321, %v717, -10000.0
        %v723 = vsel %vm452, %v722, -inf
        %724 = vmax.xlane.f32.xlu0 %v723
        %v725 = vpop.xlane.xlu0 %724
        %v726 = vsub.f32 %v722, %v725
        %v727 = vmul.f32 %v726, 1.442695
        %v728 = vpow.pop %v727
        %v729 = vsel %vm452, %v728, 0.0
        %730 = vadd.xlane.f32.xlu0 %v729
        %v731 = vpop.xlane.xlu0 %730
        %v732 = vrcp.pop %v731
        %v733 = vmul.f32 %v728, %v732
        %v734 = vpack.c.bf16 %v733, %v733
        %735 = vrot.lane.b32.xlu0 %v448, 64
        %v736 = vpop.permute.xlu0 %735
        %v738 = vsel %vm452, %v734, 0
        %v741 = vsel %vm582, %v736, 0
        %743 = vmatprep.subr.bf16.mxu0 0
        %744 = vmatpush1.bf16.msra.mxu0 %v741
        %745 = vmatprep.subr.bf16.mxu0 0
        %746 = vmatpush1.bf16.msra.mxu0 0
        %747 = vmatprep.subr.bf16.mxu0 0
        %748 = vmatpush1.bf16.msra.mxu0 0
        %749 = vmatprep.subr.bf16.mxu0 0
        %750 = vmatpush1.bf16.msra.mxu0 0
        %751 = vmatprep.subr.bf16.mxu0 0
        %752 = vmatpush1.bf16.msra.mxu0 0
        %753 = vmatprep.subr.bf16.mxu0 0
        %754 = vmatpush1.bf16.msra.mxu0 0
        %755 = vmatprep.subr.bf16.mxu0 0
        %756 = vmatpush1.bf16.msra.mxu0 0
        %757 = vmatprep.subr.bf16.mxu0 0
        %758 = vmatpush1.bf16.msra.mxu0 0
        %759 = vmatprep.subr.bf16.mxu0 0
        %760 = vmatpush1.bf16.msra.mxu0 0
        %761 = vmatprep.subr.bf16.mxu0 0
        %762 = vmatpush1.bf16.msra.mxu0 0
        %763 = vmatprep.subr.bf16.mxu0 0
        %764 = vmatpush1.bf16.msra.mxu0 0
        %765 = vmatprep.subr.bf16.mxu0 0
        %766 = vmatpush1.bf16.msra.mxu0 0
        %767 = vmatprep.subr.bf16.mxu0 0
        %768 = vmatpush1.bf16.msra.mxu0 0
        %769 = vmatprep.subr.bf16.mxu0 0
        %770 = vmatpush1.bf16.msra.mxu0 0
        %771 = vmatprep.subr.bf16.mxu0 0
        %772 = vmatpush1.bf16.msra.mxu0 0
        %773 = vmatprep.subr.bf16.mxu0 0
        %774 = vmatpush1.bf16.msra.mxu0 0
        %775 = vmatprep.mubr.bf16.mxu0 0
        %776 = vmatmul.mubr.bf16.gmra.mrb[0].mxu0 %v738
        %v777 = vpop.f32.mrb[0].mxu0
        %v778 = vadd.f32 0.0, %v777
        %v779 = vpop.f32.mrb[0].mxu0
        %v780 = vpop.f32.mrb[0].mxu0
        %v781 = vpop.f32.mrb[0].mxu0
        %782 = vdwg.mxu0
        %v783 = vadd.f32 %v667, %v778
        %784 = vrot.lane.b32.xlu0 %v446, 104
        %v785 = vpop.permute.xlu0 %784
        %786 = vrot.lane.b32.xlu0 %v447, 72
        %v787 = vpop.permute.xlu0 %786
        %v789 = vsel %vm452, %v785, 0
        %v792 = vsel %vm452, %v787, 0
        %794 = vmatprep.subr.bf16.mxu0 0
        %795 = vmatpush1.bf16.xpose.msra.mxu0 %v792
        %796 = vmatprep.subr.bf16.mxu0 0
        %797 = vmatpush1.bf16.xpose.msra.mxu0 0
        %798 = vmatprep.subr.bf16.mxu0 0
        %799 = vmatpush1.bf16.xpose.msra.mxu0 0
        %800 = vmatprep.subr.bf16.mxu0 0
        %801 = vmatpush1.bf16.xpose.msra.mxu0 0
        %802 = vmatprep.subr.bf16.mxu0 0
        %803 = vmatpush1.bf16.xpose.msra.mxu0 0
        %804 = vmatprep.subr.bf16.mxu0 0
        %805 = vmatpush1.bf16.xpose.msra.mxu0 0
        %806 = vmatprep.subr.bf16.mxu0 0
        %807 = vmatpush1.bf16.xpose.msra.mxu0 0
        %808 = vmatprep.subr.bf16.mxu0 0
        %809 = vmatpush1.bf16.xpose.msra.mxu0 0
        %810 = vmatprep.subr.bf16.mxu0 0
        %811 = vmatpush1.bf16.xpose.msra.mxu0 0
        %812 = vmatprep.subr.bf16.mxu0 0
        %813 = vmatpush1.bf16.xpose.msra.mxu0 0
        %814 = vmatprep.subr.bf16.mxu0 0
        %815 = vmatpush1.bf16.xpose.msra.mxu0 0
        %816 = vmatprep.subr.bf16.mxu0 0
        %817 = vmatpush1.bf16.xpose.msra.mxu0 0
        %818 = vmatprep.subr.bf16.mxu0 0
        %819 = vmatpush1.bf16.xpose.msra.mxu0 0
        %820 = vmatprep.subr.bf16.mxu0 0
        %821 = vmatpush1.bf16.xpose.msra.mxu0 0
        %822 = vmatprep.subr.bf16.mxu0 0
        %823 = vmatpush1.bf16.xpose.msra.mxu0 0
        %824 = vmatprep.subr.bf16.mxu0 0
        %825 = vmatpush1.bf16.xpose.msra.mxu0 0
        %826 = vmatprep.mubr.bf16.mxu0 0
        %827 = vmatmul.mubr.bf16.gmra.mrb[0].mxu0 %v789
        %v828 = vpop.f32.mrb[0].mxu0
        %v829 = vadd.f32 0.0, %v828
        %v830 = vpop.f32.mrb[0].mxu0
        %v831 = vpop.f32.mrb[0].mxu0
        %v832 = vpop.f32.mrb[0].mxu0
        %833 = vdwg.mxu0
        %v834 = vsel %vm321, %v829, -10000.0
        %v835 = vsel %vm452, %v834, -inf
        %836 = vmax.xlane.f32.xlu0 %v835
        %v837 = vpop.xlane.xlu0 %836
        %v838 = vsub.f32 %v834, %v837
        %v839 = vmul.f32 %v838, 1.442695
        %v840 = vpow.pop %v839
        %v841 = vsel %vm452, %v840, 0.0
        %842 = vadd.xlane.f32.xlu0 %v841
        %v843 = vpop.xlane.xlu0 %842
        %v844 = vrcp.pop %v843
        %v845 = vmul.f32 %v840, %v844
        %v846 = vpack.c.bf16 %v845, %v845
        %847 = vrot.lane.b32.xlu0 %v448, 32
        %v848 = vpop.permute.xlu0 %847
        %v850 = vsel %vm452, %v846, 0
        %v853 = vsel %vm582, %v848, 0
        %855 = vmatprep.subr.bf16.mxu0 0
        %856 = vmatpush1.bf16.msra.mxu0 %v853
        %857 = vmatprep.subr.bf16.mxu0 0
        %858 = vmatpush1.bf16.msra.mxu0 0
        %859 = vmatprep.subr.bf16.mxu0 0
        %860 = vmatpush1.bf16.msra.mxu0 0
        %861 = vmatprep.subr.bf16.mxu0 0
        %862 = vmatpush1.bf16.msra.mxu0 0
        %863 = vmatprep.subr.bf16.mxu0 0
        %864 = vmatpush1.bf16.msra.mxu0 0
        %865 = vmatprep.subr.bf16.mxu0 0
        %866 = vmatpush1.bf16.msra.mxu0 0
        %867 = vmatprep.subr.bf16.mxu0 0
        %868 = vmatpush1.bf16.msra.mxu0 0
        %869 = vmatprep.subr.bf16.mxu0 0
        %870 = vmatpush1.bf16.msra.mxu0 0
        %871 = vmatprep.subr.bf16.mxu0 0
        %872 = vmatpush1.bf16.msra.mxu0 0
        %873 = vmatprep.subr.bf16.mxu0 0
        %874 = vmatpush1.bf16.msra.mxu0 0
        %875 = vmatprep.subr.bf16.mxu0 0
        %876 = vmatpush1.bf16.msra.mxu0 0
        %877 = vmatprep.subr.bf16.mxu0 0
        %878 = vmatpush1.bf16.msra.mxu0 0
        %879 = vmatprep.subr.bf16.mxu0 0
        %880 = vmatpush1.bf16.msra.mxu0 0
        %881 = vmatprep.subr.bf16.mxu0 0
        %882 = vmatpush1.bf16.msra.mxu0 0
        %883 = vmatprep.subr.bf16.mxu0 0
        %884 = vmatpush1.bf16.msra.mxu0 0
        %885 = vmatprep.subr.bf16.mxu0 0
        %886 = vmatpush1.bf16.msra.mxu0 0
        %887 = vmatprep.mubr.bf16.mxu0 0
        %888 = vmatmul.mubr.bf16.gmra.mrb[0].mxu0 %v850
        %v889 = vpop.f32.mrb[0].mxu0
        %v890 = vadd.f32 0.0, %v889
        %v891 = vpop.f32.mrb[0].mxu0
        %v892 = vpop.f32.mrb[0].mxu0
        %v893 = vpop.f32.mrb[0].mxu0
        %894 = vdwg.mxu0
        %v895 = vadd.f32 %v783, %v890
        %v896 = vlaneseq
        %v897 = vshrl.u32 %v896, 7
        %v898 = vsub.s32 1, %v897
        %v899 = vrot.slane %v322, %v898
        %v900 = vadd.f32 %v895, %v899
        %v901 = vadd.f32 %v900, %v319
        %v902 = vsel %vm340, %v901, 0.0
        %903 = vadd.xlane.f32.xlu0 %v902
        %v904 = vpop.xlane.xlu0 %903
        %v905 = vrcp.pop 32.0
        %v906 = vmul.f32 %v904, %v905
        %v907 = vsub.f32 %v901, %v906
        %v908 = vmul.f32 %v907, %v907
        %v909 = vsel %vm340, %v908, 0.0
        %910 = vadd.xlane.f32.xlu0 %v909
        %v911 = vpop.xlane.xlu0 %910
        %v912 = vmul.f32 %v911, %v905
        %v913 = vadd.f32 %v912, 1e-12
        %v914 = vrsqrt.pop %v913
        %v915 = vmul.f32 %v907, %v914
        %v916 = vlaneseq
        %v917 = vshrl.u32 %v916, 7
        %v918 = vsub.s32 2, %v917
        %v919 = vrot.slane %v322, %v918
        %v920 = vmul.f32 %v915, %v919
        %v921 = vlaneseq
        %v922 = vshrl.u32 %v921, 7
        %v923 = vsub.s32 3, %v922
        %v924 = vrot.slane %v322, %v923
        %v925 = vadd.f32 %v920, %v924
        %v926 = vpack.c.bf16 %v925, %v925
        %v927 = vld [vmem:[%s4] sm:$0xf]
        %v928 = vld [vmem:[%s4 + $0x4] sm:$0xf]
        %v929 = vld [vmem:[%s4 + $0x8] sm:$0xf]
        %v930 = vld [vmem:[%s4 + $0xc] sm:$0xf]
        %v931 = vld [vmem:[%s5] sm:$0x1]
        %v933 = vlaneseq
        %v934 = vshrl.u32 %v933, 7
        %v935 = vsub.s32 0, %v934
        %v936 = vrot.slane %v931, %v935
        %v942 = vunpack.c.l.b16 %v927
        %v943 = vunpack.c.l.b16 %v928
        %v944 = vunpack.c.l.b16 %v929
        %v945 = vunpack.c.l.b16 %v930
        %v946 = vpack.c.b16 %v943, %v942
        %v947 = vpack.c.b16 %v945, %v944
        %v951 = vsel %vm340, %v926, 0
        %953 = vmatprep.subr.bf16.mxu0 0
        %954 = vmatpush1.bf16.msra.mxu0 %v946
        %955 = vmatprep.subr.bf16.mxu0 0
        %956 = vmatpush1.bf16.msra.mxu0 %v947
        %957 = vmatprep.subr.bf16.mxu0 0
        %958 = vmatpush1.bf16.msra.mxu0 0
        %959 = vmatprep.subr.bf16.mxu0 0
        %960 = vmatpush1.bf16.msra.mxu0 0
        %961 = vmatprep.subr.bf16.mxu0 0
        %962 = vmatpush1.bf16.msra.mxu0 0
        %963 = vmatprep.subr.bf16.mxu0 0
        %964 = vmatpush1.bf16.msra.mxu0 0
        %965 = vmatprep.subr.bf16.mxu0 0
        %966 = vmatpush1.bf16.msra.mxu0 0
        %967 = vmatprep.subr.bf16.mxu0 0
        %968 = vmatpush1.bf16.msra.mxu0 0
        %969 = vmatprep.subr.bf16.mxu0 0
        %970 = vmatpush1.bf16.msra.mxu0 0
        %971 = vmatprep.subr.bf16.mxu0 0
        %972 = vmatpush1.bf16.msra.mxu0 0
        %973 = vmatprep.subr.bf16.mxu0 0
        %974 = vmatpush1.bf16.msra.mxu0 0
        %975 = vmatprep.subr.bf16.mxu0 0
        %976 = vmatpush1.bf16.msra.mxu0 0
        %977 = vmatprep.subr.bf16.mxu0 0
        %978 = vmatpush1.bf16.msra.mxu0 0
        %979 = vmatprep.subr.bf16.mxu0 0
        %980 = vmatpush1.bf16.msra.mxu0 0
        %981 = vmatprep.subr.bf16.mxu0 0
        %982 = vmatpush1.bf16.msra.mxu0 0
        %983 = vmatprep.subr.bf16.mxu0 0
        %984 = vmatpush1.bf16.msra.mxu0 0
        %985 = vmatprep.mubr.bf16.mxu0 0
        %986 = vmatmul.mubr.bf16.gmra.mrb[0].mxu0 %v951
        %v987 = vpop.f32.mrb[0].mxu0
        %v988 = vadd.f32 %v936, %v987
        %v989 = vpop.f32.mrb[0].mxu0
        %v990 = vpop.f32.mrb[0].mxu0
        %v991 = vpop.f32.mrb[0].mxu0
        %992 = vdwg.mxu0
        %v993 = vmax.f32 %v988, 0.0
        %v994 = vpack.c.bf16 %v993, %v993
        %v995 = vld [vmem:[%s6] sm:$0xf]
        %v996 = vld [vmem:[%s6 + $0x4] sm:$0xf]
        %v997 = vld [vmem:[%s6 + $0x8] sm:$0xf]
        %v998 = vld [vmem:[%s6 + $0xc] sm:$0xf]
        %v999 = vld [vmem:[%s6 + $0x10] sm:$0xf]
        %v1000 = vld [vmem:[%s6 + $0x14] sm:$0xf]
        %v1001 = vld [vmem:[%s6 + $0x18] sm:$0xf]
        %v1002 = vld [vmem:[%s6 + $0x1c] sm:$0xf]
        %v1003 = vlaneseq
        %v1004 = vshrl.u32 %v1003, 7
        %v1005 = vsub.s32 4, %v1004
        %v1006 = vrot.slane %v322, %v1005
        %v1015 = vunpack.c.l.b16 %v995
        %v1016 = vunpack.c.l.b16 %v996
        %v1017 = vunpack.c.l.b16 %v997
        %v1018 = vunpack.c.l.b16 %v998
        %v1019 = vunpack.c.l.b16 %v999
        %v1020 = vunpack.c.l.b16 %v1000
        %v1021 = vunpack.c.l.b16 %v1001
        %v1022 = vunpack.c.l.b16 %v1002
        %v1023 = vpack.c.b16 %v1016, %v1015
        %v1024 = vpack.c.b16 %v1018, %v1017
        %v1025 = vpack.c.b16 %v1020, %v1019
        %v1026 = vpack.c.b16 %v1022, %v1021
        %vm1031 = vcmask 523264
        %v1033 = vsel %vm1031, %v994, 0
        %1035 = vmatprep.subr.bf16.mxu0 0
        %1036 = vmatpush1.bf16.msra.mxu0 %v1023
        %1037 = vmatprep.subr.bf16.mxu0 0
        %1038 = vmatpush1.bf16.msra.mxu0 %v1024
        %1039 = vmatprep.subr.bf16.mxu0 0
        %1040 = vmatpush1.bf16.msra.mxu0 %v1025
        %1041 = vmatprep.subr.bf16.mxu0 0
        %1042 = vmatpush1.bf16.msra.mxu0 %v1026
        %1043 = vmatprep.subr.bf16.mxu0 0
        %1044 = vmatpush1.bf16.msra.mxu0 0
        %1045 = vmatprep.subr.bf16.mxu0 0
        %1046 = vmatpush1.bf16.msra.mxu0 0
        %1047 = vmatprep.subr.bf16.mxu0 0
        %1048 = vmatpush1.bf16.msra.mxu0 0
        %1049 = vmatprep.subr.bf16.mxu0 0
        %1050 = vmatpush1.bf16.msra.mxu0 0
        %1051 = vmatprep.subr.bf16.mxu0 0
        %1052 = vmatpush1.bf16.msra.mxu0 0
        %1053 = vmatprep.subr.bf16.mxu0 0
        %1054 = vmatpush1.bf16.msra.mxu0 0
        %1055 = vmatprep.subr.bf16.mxu0 0
        %1056 = vmatpush1.bf16.msra.mxu0 0
        %1057 = vmatprep.subr.bf16.mxu0 0
        %1058 = vmatpush1.bf16.msra.mxu0 0
        %1059 = vmatprep.subr.bf16.mxu0 0
        %1060 = vmatpush1.bf16.msra.mxu0 0
        %1061 = vmatprep.subr.bf16.mxu0 0
        %1062 = vmatpush1.bf16.msra.mxu0 0
        %1063 = vmatprep.subr.bf16.mxu0 0
        %1064 = vmatpush1.bf16.msra.mxu0 0
        %1065 = vmatprep.subr.bf16.mxu0 0
        %1066 = vmatpush1.bf16.msra.mxu0 0
        %1067 = vmatprep.mubr.bf16.mxu0 0
        %1068 = vmatmul.mubr.bf16.gmra.mrb[0].mxu0 %v1033
        %v1069 = vpop.f32.mrb[0].mxu0
        %v1070 = vadd.f32 %v1006, %v1069
        %v1071 = vpop.f32.mrb[0].mxu0
        %v1072 = vpop.f32.mrb[0].mxu0
        %v1073 = vpop.f32.mrb[0].mxu0
        %1074 = vdwg.mxu0
        %v1075 = vadd.f32 %v1070, %v925
        %v1076 = vsel %vm340, %v1075, 0.0
        %1077 = vadd.xlane.f32.xlu0 %v1076
        %v1078 = vpop.xlane.xlu0 %1077
        %v1079 = vmul.f32 %v1078, %v905
        %v1080 = vsub.f32 %v1075, %v1079
        %v1081 = vmul.f32 %v1080, %v1080
        %v1082 = vsel %vm340, %v1081, 0.0
        %1083 = vadd.xlane.f32.xlu0 %v1082
        %v1084 = vpop.xlane.xlu0 %1083
        %v1085 = vmul.f32 %v1084, %v905
        %v1086 = vadd.f32 %v1085, 1e-12
        %v1087 = vrsqrt.pop %v1086
        %v1088 = vmul.f32 %v1080, %v1087
        %v1089 = vlaneseq
        %v1090 = vshrl.u32 %v1089, 7
        %v1091 = vsub.s32 5, %v1090
        %v1092 = vrot.slane %v322, %v1091
        %v1093 = vmul.f32 %v1088, %v1092
        %v1094 = vlaneseq
        %v1095 = vshrl.u32 %v1094, 7
        %v1096 = vsub.s32 6, %v1095
        %v1097 = vrot.slane %v322, %v1096
        %v1098 = vadd.f32 %v1093, %v1097
        %1099 = vst.msk [vmem:[%s309] sm:$0xff] %vm340, %v1098
        %s1100 = sand.u32 %s208, 1
        %s1101 = scalar_lea.sflag [#allocation3], %s1100
        %s1102 = sand.u32 %s208, 1
        %s1103 = smul.addr %s1102, 8
        %s1104 = scalar_lea.vmem [#allocation2], %s1103
        // Predicated region
        $region53: #{encoder_layer.1} parent=51 // pred_check
          %p1105 = pneg %p218
        $region54: #{encoder_layer.1} parent=51 // pred_check_branch
          %1107 = sbr.rel (%p1105) target = $region56
        $region55: #{encoder_layer.1} parent=51 // pred_region
          %s1109 = ssub.s32 128, 128
          %1110 = vsyncadd %s1101, %s1109
          %s1111 = smul.addr %s22, 128
          %s1112 = scalar_lea.hbm %s8, %s1111
          %s1114 = sshll.u32 %s1104, 4
          %s1115 = int_to_ptr.vmem [resolvable:$true] %s1114
          %1117 = dma.vmem_to_hbm [thread:$0]  %s1115, 128, %s1112, %s1101
        $region56: #{encoder_layer.1} parent=51 // pred_fallthru
          _
      $region52: #{encoder_layer.1} parent=5 // pred_fallthru
        _
      %p1118 = scmp.le.s32.totalorder 2, %s17
      // Predicated region
      $region57: #{encoder_layer.1} parent=5 // pred_check
        %p1119 = pneg %p1118
      $region58: #{encoder_layer.1} parent=5 // pred_check_branch
        %1121 = sbr.rel (%p1119) target = $region60
      $region59: #{encoder_layer.1} parent=5 // pred_region
        %s1122 = ssub.s32 %s17, 2
        // Predicated region
        $region61: #{encoder_layer.1} parent=59 // pred_check
          %p1123 = pneg %p224
        $region62: #{encoder_layer.1} parent=59 // pred_check_branch
          %1125 = sbr.rel (%p1123) target = $region64
        $region63: #{encoder_layer.1} parent=59 // pred_region
          %s1126 = sand.u32 %s209, 1
          %s1127 = scalar_lea.sflag [#allocation3], %s1126
          %s1128 = sand.u32 %s209, 1
          %s1129 = smul.addr %s1128, 8
          %s1130 = scalar_lea.vmem [#allocation2], %s1129
          %1131 = dma.done %s1127, 128
        $region64: #{encoder_layer.1} parent=59 // pred_fallthru
          _
      $region60: #{encoder_layer.1} parent=5 // pred_fallthru
        _
    $region6: #{encoder_layer.1} parent=1 // loop_footer
      %s21 = sadd.s32 1, %s17
    $region7: #{encoder_layer.1} parent=1 // loop_footer_branch
      %16 = sbr.rel target = $region3
    $region8: #{encoder_layer.1} parent=1 // loop_exit
      _
    %1132 = vsyncpa [#allocation3], 1
    %s1133 = scalar_lea.sflag [#allocation3], 1
    %1134 = vsyncpa %s1133, 1

</llo_original>
